<compile_context>
chip_gen: v7x
topology: tpu7x:2x2x1
jax: 0.10.0
libtpu: 0.0.40
codegen_flags: <defaults>
</compile_context>

<pallas_src>
import jax
import jax.numpy as jnp
import numpy as np
from jax.experimental import pallas as pl
from jax.experimental.pallas import tpu as pltpu

# ----------------------- deterministic hyper-parameters ----------------------
MS_ALPHA = 2.0             # MultiSimilarity alpha
MS_BETA = 50.0             # MultiSimilarity beta
MS_BASE = 0.5              # MultiSimilarity base
CONTRAST_POS_MARGIN = 1.0  # contrastive: penalize s_ap < 1
CONTRAST_NEG_MARGIN = 0.0  # contrastive: penalize s_an > 0
COMBINED_BETA = 0.3        # the `beta` of the Combined module

# 128 is safe/fast on every generation (v5e MXU native tile, fits default
# scoped VMEM everywhere).  On v6e/v7x with large batches TILE=256 halves
# key-tile HBM re-reads (re-budget VMEM + set vmem_limit_bytes if raised).
TILE = 128


def _round_up(x, m):
    return ((x + m - 1) // m) * m


# --------------------------------- kernel ------------------------------------
def _make_kernel(tm, tn):
    """Kernel over one (anchor-tile, key-tile) grid step."""

    def kernel(lab_i_ref, lab_j_ref, di_ref, dj_ref, out_ref,
               acc_pe, acc_ne, acc_cp, acc_cn):
        i = pl.program_id(0)
        j = pl.program_id(1)
        nj = pl.num_programs(1)

        @pl.when(j == 0)
        def _init():
            acc_pe[...] = jnp.zeros_like(acc_pe)
            acc_ne[...] = jnp.zeros_like(acc_ne)
            acc_cp[...] = jnp.zeros_like(acc_cp)
            acc_cn[...] = jnp.zeros_like(acc_cn)

        # --- similarity tile: pre-normalized bf16 tiles, NT matmul on the
        # --- MXU with f32 accumulation (no in-kernel normalization).
        sim = jax.lax.dot_general(
            di_ref[...], dj_ref[...],
            dimension_numbers=(((1,), (1,)), ((), ())),
            preferred_element_type=jnp.float32)                     # (tm, tn)

        # --- pair masks from labels only (no HBM masks, no validity iotas) ---
        lab_i = lab_i_ref[...]                                      # (tm, 1)
        lab_j = lab_j_ref[...]                                      # (1, tn)
        same = lab_i == lab_j                                       # (tm, tn)
        # row padding uses label -1, col padding -2 => `same` is already False
        # for any pair touching padding; validity only needed for negatives.
        valid = (lab_i >= 0) & (lab_j >= 0)                         # (tm, tn)
        # self-pair (diagonal) exclusion; only bites on diagonal tiles.
        row_ids = (jax.lax.broadcasted_iota(jnp.int32, (tm, tn), 0)
                   + (i - j) * tm)
        col_ids = jax.lax.broadcasted_iota(jnp.int32, (tm, tn), 1)
        pos_m = same & (row_ids != col_ids)
        neg_m = jnp.logical_not(same) & valid

        # --- accumulate lane-wide partials (VPU adds only; XLU reductions
        # --- are deferred to the per-anchor-tile finalize) -------------------
        acc_pe[...] += jnp.where(pos_m, jnp.exp(-MS_ALPHA * (sim - MS_BASE)), 0.0)
        acc_ne[...] += jnp.where(neg_m, jnp.exp(MS_BETA * (sim - MS_BASE)), 0.0)
        acc_cp[...] += jnp.where(pos_m,
                                 jnp.maximum(CONTRAST_POS_MARGIN - sim, 0.0), 0.0)
        acc_cn[...] += jnp.where(neg_m,
                                 jnp.maximum(sim - CONTRAST_NEG_MARGIN, 0.0), 0.0)

        # --- finalize this anchor tile on the last key step ------------------
        @pl.when(j == nj - 1)
        def _fin():
            pe = jnp.sum(acc_pe[...], axis=-1, keepdims=True)       # (tm, 1)
            ne = jnp.sum(acc_ne[...], axis=-1, keepdims=True)       # (tm, 1)
            # anchors with no pairs (incl. padded anchors) give exactly 0 here,
            # so no has_pair gating is needed in-kernel.
            per_anchor = (jnp.log(1.0 + pe) / MS_ALPHA
                          + jnp.log(1.0 + ne) / MS_BETA)            # (tm, 1)
            ms_num = jnp.sum(per_anchor, keepdims=True)             # (1, 1)
            ploss = jnp.sum(acc_cp[...], keepdims=True)             # (1, 1)
            nloss = jnp.sum(acc_cn[...], keepdims=True)             # (1, 1)

            # pack 3 scalar partials into a lane-dense (8,128) output block
            lane = jax.lax.broadcasted_iota(jnp.int32, (8, 128), 1)
            row = jnp.zeros((8, 128), jnp.float32)
            row = jnp.where(lane == 0, ms_num, row)
            row = jnp.where(lane == 1, ploss, row)
            row = jnp.where(lane == 2, nloss, row)
            out_ref[0] = row

    return kernel


# -------------------------------- wrapper -------------------------------------
def combined_loss(descriptors, labels, miner_outputs=None):
    """Mirrors Combined.forward(descriptors, labels, miner_outputs).

    loss1/loss2 are the MultiSimilarity + cosine-contrastive pair losses over
    all-pairs-mined pairs, so the pair masks are a pure function of `labels`
    and are rebuilt inside the kernel (no dense (N,N) masks in HBM).
    `miner_outputs` is accepted for API parity with the PyTorch module.
    """
    # TODO(synk): arbitrary (non-all-pairs) miner_outputs would need a mask /
    # index-scatter path; this deterministic instantiation assumes all-pairs,
    # so miner_outputs is accepted but ignored.
    del miner_outputs
    N, D = descriptors.shape
    n_pad = _round_up(max(N, TILE), TILE)
    d_pad = _round_up(D, 128)
    n_tiles = n_pad // TILE

    # One XLA pass over (N, D): f32 L2-normalize, cast to bf16, pad.
    # Padded rows are exactly zero, so their similarities are exactly zero.
    d = descriptors.astype(jnp.float32)
    dn = d * jax.lax.rsqrt(jnp.sum(d * d, axis=-1, keepdims=True) + 1e-12)
    desc = jnp.pad(dn.astype(jnp.bfloat16), ((0, n_pad - N), (0, d_pad - D)))

    lab = labels.astype(jnp.int32)
    # distinct pad values for rows (-1) vs cols (-2): `same` never fires on
    # padding, and `label >= 0` doubles as the validity check in-kernel.
    lab_row = jnp.pad(lab, (0, n_pad - N), constant_values=-1).reshape(n_pad, 1)
    lab_col = jnp.pad(lab, (0, n_pad - N), constant_values=-2).reshape(1, n_pad)

    kernel = _make_kernel(TILE, TILE)
    parts = pl.pallas_call(
        kernel,
        out_shape=jax.ShapeDtypeStruct((n_tiles, 8, 128), jnp.float32),
        grid=(n_tiles, n_tiles),
        in_specs=[
            pl.BlockSpec((TILE, 1), lambda i, j: (i, 0)),       # anchor labels
            pl.BlockSpec((1, TILE), lambda i, j: (0, j)),       # key labels
            pl.BlockSpec((TILE, d_pad), lambda i, j: (i, 0)),   # anchor descriptors
            pl.BlockSpec((TILE, d_pad), lambda i, j: (j, 0)),   # key descriptors
        ],
        out_specs=pl.BlockSpec((1, 8, 128), lambda i, j: (i, 0, 0)),
        scratch_shapes=[pltpu.VMEM((TILE, TILE), jnp.float32)] * 4,
        compiler_params=pltpu.CompilerParams(
            dimension_semantics=("parallel", "arbitrary")),
    )(lab_row, lab_col, desc, desc)

    # Denominators / counts are pure label functions (tiny wrapper-side work;
    # never enters the kernel and never produces f32 (N,N) HBM traffic).
    eq = lab[:, None] == lab[None, :]
    same_cnt = jnp.sum(eq, axis=-1).astype(jnp.float32)         # includes self
    pos_per = same_cnt - 1.0
    neg_per = jnp.float32(N) - same_cnt
    p_cnt = jnp.sum(pos_per)
    n_cnt = jnp.sum(neg_per)
    ms_den = jnp.sum(((pos_per + neg_per) > 0.0).astype(jnp.float32))

    # tiny final combine (3 scalars per anchor tile) in plain JAX
    p = parts[:, 0, :]                                           # (n_tiles, 128)
    ms_num = jnp.sum(p[:, 0])
    ploss = jnp.sum(p[:, 1])
    nloss = jnp.sum(p[:, 2])
    l1 = ms_num / jnp.maximum(ms_den, 1.0)
    l2 = ploss / jnp.maximum(p_cnt, 1.0) + nloss / jnp.maximum(n_cnt, 1.0)
    return l1 + COMBINED_BETA * l2


# ------------------------------ pure-JAX reference -----------------------------
def combined_loss_ref(descriptors, labels):
    d = descriptors.astype(jnp.float32)
    dn = d * jax.lax.rsqrt(jnp.sum(d * d, axis=-1, keepdims=True) + 1e-12)
    sim = dn @ dn.T
    same = labels[:, None] == labels[None, :]
    eye = jnp.eye(labels.shape[0], dtype=bool)
    pos_m = same & ~eye
    neg_m = ~same
    pos_exp = jnp.where(pos_m, jnp.exp(-MS_ALPHA * (sim - MS_BASE)), 0.0)
    neg_exp = jnp.where(neg_m, jnp.exp(MS_BETA * (sim - MS_BASE)), 0.0)
    per_anchor = (jnp.log(1.0 + pos_exp.sum(-1)) / MS_ALPHA
                  + jnp.log(1.0 + neg_exp.sum(-1)) / MS_BETA)
    pos_f = pos_m.astype(jnp.float32)
    neg_f = neg_m.astype(jnp.float32)
    has_pair = ((pos_f.sum(-1) + neg_f.sum(-1)) > 0).astype(jnp.float32)
    l1 = jnp.sum(per_anchor * has_pair) / jnp.maximum(has_pair.sum(), 1.0)
    ploss = jnp.where(pos_m, jnp.maximum(CONTRAST_POS_MARGIN - sim, 0.0), 0.0).sum()
    nloss = jnp.where(neg_m, jnp.maximum(sim - CONTRAST_NEG_MARGIN, 0.0), 0.0).sum()
    l2 = ploss / jnp.maximum(pos_f.sum(), 1.0) + nloss / jnp.maximum(neg_f.sum(), 1.0)
    return l1 + COMBINED_BETA * l2


def all_pairs_miner(labels_np):
    """All-pairs miner: positives = same label (i != j), negatives = diff label."""
    eq = labels_np[:, None] == labels_np[None, :]
    eye = np.eye(labels_np.shape[0], dtype=bool)
    a1, p = np.nonzero(eq & ~eye)
    a2, n = np.nonzero(~eq)
    return (jnp.asarray(a1), jnp.asarray(p), jnp.asarray(a2), jnp.asarray(n))


# ---------------------------------- main ---------------------------------------
if __name__ == "__main__":
    key = jax.random.PRNGKey(0)
    N, D = 200, 128                       # small batch; pads to 256 -> 2x2 grid
    descriptors = jax.random.normal(key, (N, D), dtype=jnp.float32)
    labels_np = np.repeat(np.arange(8), 25).astype(np.int32)   # 8 classes x 25
    labels = jnp.asarray(labels_np)
    miner_outputs = all_pairs_miner(labels_np)                 # API parity only

    loss = combined_loss(descriptors, labels, miner_outputs)
    jax.block_until_ready(loss)

    ref = combined_loss_ref(descriptors, labels)
    assert jnp.isfinite(loss), "loss is not finite"
    assert abs(float(loss) - float(ref)) <= 2e-2 * abs(float(ref)) + 2e-3, (
        f"kernel {float(loss)} vs reference {float(ref)}")
    print("KERNEL_OK")
</pallas_src>

<mosaic_0001>
module attributes {stable_mosaic.version = 11 : i64} {
  func.func @kernel(%arg0: i32, %arg1: i32, %arg2: memref<128x1xi32, #tpu.memory_space<vmem>>, %arg3: memref<1x128xi32, #tpu.memory_space<vmem>>, %arg4: memref<128x128xbf16, #tpu.memory_space<vmem>>, %arg5: memref<128x128xbf16, #tpu.memory_space<vmem>>, %arg6: memref<1x8x128xf32, #tpu.memory_space<vmem>>, %arg7: memref<128x128xf32, #tpu.memory_space<vmem>>, %arg8: memref<128x128xf32, #tpu.memory_space<vmem>>, %arg9: memref<128x128xf32, #tpu.memory_space<vmem>>, %arg10: memref<128x128xf32, #tpu.memory_space<vmem>>) attributes {dimension_semantics = [#tpu.dimension_semantics<parallel>, #tpu.dimension_semantics<arbitrary>], iteration_bounds = array<i64: 2, 2>, scalar_prefetch = 0 : i64, scratch_operands = 4 : i64, tpu.core_type = #tpu.core_type<tc>, window_params = [{transform_indices = @transform_0, window_bounds = array<i64: 128, 1>}, {transform_indices = @transform_1, window_bounds = array<i64: 1, 128>}, {transform_indices = @transform_2, window_bounds = array<i64: 128, 128>}, {transform_indices = @transform_3, window_bounds = array<i64: 128, 128>}, {transform_indices = @transform_4, window_bounds = array<i64: 1, 8, 128>}]} {
    %c0_i32 = arith.constant 0 : i32
    %0 = arith.cmpi eq, %arg1, %c0_i32 : i32
    %1 = arith.extui %0 : i1 to i32
    %c0_i32_0 = arith.constant 0 : i32
    %2 = arith.cmpi ne, %1, %c0_i32_0 : i32
    scf.if %2 {
      %cst_40 = arith.constant 0.000000e+00 : f32
      %69 = vector.broadcast %cst_40 : f32 to vector<128x128xf32>
      %c0_41 = arith.constant 0 : index
      %c0_42 = arith.constant 0 : index
      %70 = vector.load %arg7[%c0_41, %c0_42] : memref<128x128xf32, #tpu.memory_space<vmem>>, vector<128x128xf32>
      tpu.vector_store %arg7[%c0_41, %c0_42], %69 {strides = array<i32>} : memref<128x128xf32, #tpu.memory_space<vmem>>, vector<128x128xf32>,
      %cst_43 = arith.constant 0.000000e+00 : f32
      %71 = vector.broadcast %cst_43 : f32 to vector<128x128xf32>
      %c0_44 = arith.constant 0 : index
      %c0_45 = arith.constant 0 : index
      %72 = vector.load %arg8[%c0_44, %c0_45] : memref<128x128xf32, #tpu.memory_space<vmem>>, vector<128x128xf32>
      tpu.vector_store %arg8[%c0_44, %c0_45], %71 {strides = array<i32>} : memref<128x128xf32, #tpu.memory_space<vmem>>, vector<128x128xf32>,
      %cst_46 = arith.constant 0.000000e+00 : f32
      %73 = vector.broadcast %cst_46 : f32 to vector<128x128xf32>
      %c0_47 = arith.constant 0 : index
      %c0_48 = arith.constant 0 : index
      %74 = vector.load %arg9[%c0_47, %c0_48] : memref<128x128xf32, #tpu.memory_space<vmem>>, vector<128x128xf32>
      tpu.vector_store %arg9[%c0_47, %c0_48], %73 {strides = array<i32>} : memref<128x128xf32, #tpu.memory_space<vmem>>, vector<128x128xf32>,
      %cst_49 = arith.constant 0.000000e+00 : f32
      %75 = vector.broadcast %cst_49 : f32 to vector<128x128xf32>
      %c0_50 = arith.constant 0 : index
      %c0_51 = arith.constant 0 : index
      %76 = vector.load %arg10[%c0_50, %c0_51] : memref<128x128xf32, #tpu.memory_space<vmem>>, vector<128x128xf32>
      tpu.vector_store %arg10[%c0_50, %c0_51], %75 {strides = array<i32>} : memref<128x128xf32, #tpu.memory_space<vmem>>, vector<128x128xf32>,
    } else {
    }
    %c0 = arith.constant 0 : index
    %c0_1 = arith.constant 0 : index
    %3 = vector.load %arg4[%c0, %c0_1] : memref<128x128xbf16, #tpu.memory_space<vmem>>, vector<128x128xbf16>
    %c0_2 = arith.constant 0 : index
    %c0_3 = arith.constant 0 : index
    %4 = vector.load %arg5[%c0_2, %c0_3] : memref<128x128xbf16, #tpu.memory_space<vmem>>, vector<128x128xbf16>
    %cst = arith.constant dense<0.000000e+00> : vector<128x128xf32>
    %5 = tpu.matmul %3, %4, %cst {dimension_numbers = #tpu.dot_dimension_numbers<[1], [1], [0], [0], [0, 0, 1, 0], [], []>} : vector<128x128xbf16>, vector<128x128xbf16>, vector<128x128xf32> -> vector<128x128xf32>
    %c0_4 = arith.constant 0 : index
    %c0_5 = arith.constant 0 : index
    %6 = vector.load %arg2[%c0_4, %c0_5] : memref<128x1xi32, #tpu.memory_space<vmem>>, vector<128x1xi32>
    %c0_6 = arith.constant 0 : index
    %c0_7 = arith.constant 0 : index
    %7 = vector.load %arg3[%c0_6, %c0_7] : memref<1x128xi32, #tpu.memory_space<vmem>>, vector<1x128xi32>
    %8 = vector.broadcast %6 : vector<128x1xi32> to vector<128x128xi32>
    %9 = vector.broadcast %7 : vector<1x128xi32> to vector<128x128xi32>
    %10 = arith.cmpi eq, %8, %9 : vector<128x128xi32>
    %c0_i32_8 = arith.constant 0 : i32
    %11 = vector.broadcast %c0_i32_8 : i32 to vector<128x1xi32>
    %12 = arith.cmpi sge, %6, %11 : vector<128x1xi32>
    %c0_i32_9 = arith.constant 0 : i32
    %13 = vector.broadcast %c0_i32_9 : i32 to vector<1x128xi32>
    %14 = arith.cmpi sge, %7, %13 : vector<1x128xi32>
    %15 = vector.broadcast %12 : vector<128x1xi1> to vector<128x128xi1>
    %16 = vector.broadcast %14 : vector<1x128xi1> to vector<128x128xi1>
    %17 = arith.andi %15, %16 : vector<128x128xi1>
    %18 = tpu.iota {dimensions = array<i32: 0>} : vector<128x128xi32>
    %19 = arith.subi %arg0, %arg1 : i32
    %c128_i32 = arith.constant 128 : i32
    %20 = arith.muli %19, %c128_i32 : i32
    %21 = vector.broadcast %20 : i32 to vector<128x128xi32>
    %22 = arith.addi %18, %21 : vector<128x128xi32>
    %23 = tpu.iota {dimensions = array<i32: 1>} : vector<128x128xi32>
    %24 = arith.cmpi ne, %22, %23 : vector<128x128xi32>
    %25 = arith.andi %10, %24 : vector<128x128xi1>
    %cst_10 = arith.constant dense<true> : vector<128x128xi1>
    %26 = arith.xori %10, %cst_10 : vector<128x128xi1>
    %27 = arith.andi %26, %17 : vector<128x128xi1>
    %c0_11 = arith.constant 0 : index
    %c0_12 = arith.constant 0 : index
    %28 = vector.load %arg7[%c0_11, %c0_12] : memref<128x128xf32, #tpu.memory_space<vmem>>, vector<128x128xf32>
    %cst_13 = arith.constant 5.000000e-01 : f32
    %29 = vector.broadcast %cst_13 : f32 to vector<128x128xf32>
    %30 = arith.subf %5, %29 : vector<128x128xf32>
    %cst_14 = arith.constant -2.000000e+00 : f32
    %31 = vector.broadcast %cst_14 : f32 to vector<128x128xf32>
    %32 = arith.mulf %31, %30 : vector<128x128xf32>
    %33 = math.exp %32 : vector<128x128xf32>
    %cst_15 = arith.constant 0.000000e+00 : f32
    %34 = vector.broadcast %cst_15 : f32 to vector<128x128xf32>
    %35 = arith.select %25, %33, %34 : vector<128x128xi1>, vector<128x128xf32>
    %36 = arith.addf %28, %35 : vector<128x128xf32>
    %c0_16 = arith.constant 0 : index
    %c0_17 = arith.constant 0 : index
    %37 = vector.load %arg7[%c0_16, %c0_17] : memref<128x128xf32, #tpu.memory_space<vmem>>, vector<128x128xf32>
    tpu.vector_store %arg7[%c0_16, %c0_17], %36 {strides = array<i32>} : memref<128x128xf32, #tpu.memory_space<vmem>>, vector<128x128xf32>,
    %c0_18 = arith.constant 0 : index
    %c0_19 = arith.constant 0 : index
    %38 = vector.load %arg8[%c0_18, %c0_19] : memref<128x128xf32, #tpu.memory_space<vmem>>, vector<128x128xf32>
    %cst_20 = arith.constant 5.000000e-01 : f32
    %39 = vector.broadcast %cst_20 : f32 to vector<128x128xf32>
    %40 = arith.subf %5, %39 : vector<128x128xf32>
    %cst_21 = arith.constant 5.000000e+01 : f32
    %41 = vector.broadcast %cst_21 : f32 to vector<128x128xf32>
    %42 = arith.mulf %41, %40 : vector<128x128xf32>
    %43 = math.exp %42 : vector<128x128xf32>
    %cst_22 = arith.constant 0.000000e+00 : f32
    %44 = vector.broadcast %cst_22 : f32 to vector<128x128xf32>
    %45 = arith.select %27, %43, %44 : vector<128x128xi1>, vector<128x128xf32>
    %46 = arith.addf %38, %45 : vector<128x128xf32>
    %c0_23 = arith.constant 0 : index
    %c0_24 = arith.constant 0 : index
    %47 = vector.load %arg8[%c0_23, %c0_24] : memref<128x128xf32, #tpu.memory_space<vmem>>, vector<128x128xf32>
    tpu.vector_store %arg8[%c0_23, %c0_24], %46 {strides = array<i32>} : memref<128x128xf32, #tpu.memory_space<vmem>>, vector<128x128xf32>,
    %c0_25 = arith.constant 0 : index
    %c0_26 = arith.constant 0 : index
    %48 = vector.load %arg9[%c0_25, %c0_26] : memref<128x128xf32, #tpu.memory_space<vmem>>, vector<128x128xf32>
    %cst_27 = arith.constant 1.000000e+00 : f32
    %49 = vector.broadcast %cst_27 : f32 to vector<128x128xf32>
    %50 = arith.subf %49, %5 : vector<128x128xf32>
    %cst_28 = arith.constant 0.000000e+00 : f32
    %51 = vector.broadcast %cst_28 : f32 to vector<128x128xf32>
    %52 = arith.maximumf %50, %51 : vector<128x128xf32>
    %cst_29 = arith.constant 0.000000e+00 : f32
    %53 = vector.broadcast %cst_29 : f32 to vector<128x128xf32>
    %54 = arith.select %25, %52, %53 : vector<128x128xi1>, vector<128x128xf32>
    %55 = arith.addf %48, %54 : vector<128x128xf32>
    %c0_30 = arith.constant 0 : index
    %c0_31 = arith.constant 0 : index
    %56 = vector.load %arg9[%c0_30, %c0_31] : memref<128x128xf32, #tpu.memory_space<vmem>>, vector<128x128xf32>
    tpu.vector_store %arg9[%c0_30, %c0_31], %55 {strides = array<i32>} : memref<128x128xf32, #tpu.memory_space<vmem>>, vector<128x128xf32>,
    %c0_32 = arith.constant 0 : index
    %c0_33 = arith.constant 0 : index
    %57 = vector.load %arg10[%c0_32, %c0_33] : memref<128x128xf32, #tpu.memory_space<vmem>>, vector<128x128xf32>
    %cst_34 = arith.constant 0.000000e+00 : f32
    %58 = vector.broadcast %cst_34 : f32 to vector<128x128xf32>
    %59 = arith.subf %5, %58 : vector<128x128xf32>
    %cst_35 = arith.constant 0.000000e+00 : f32
    %60 = vector.broadcast %cst_35 : f32 to vector<128x128xf32>
    %61 = arith.maximumf %59, %60 : vector<128x128xf32>
    %cst_36 = arith.constant 0.000000e+00 : f32
    %62 = vector.broadcast %cst_36 : f32 to vector<128x128xf32>
    %63 = arith.select %27, %61, %62 : vector<128x128xi1>, vector<128x128xf32>
    %64 = arith.addf %57, %63 : vector<128x128xf32>
    %c0_37 = arith.constant 0 : index
    %c0_38 = arith.constant 0 : index
    %65 = vector.load %arg10[%c0_37, %c0_38] : memref<128x128xf32, #tpu.memory_space<vmem>>, vector<128x128xf32>
    tpu.vector_store %arg10[%c0_37, %c0_38], %64 {strides = array<i32>} : memref<128x128xf32, #tpu.memory_space<vmem>>, vector<128x128xf32>,
    %c1_i32 = arith.constant 1 : i32
    %66 = arith.cmpi eq, %arg1, %c1_i32 : i32
    %67 = arith.extui %66 : i1 to i32
    %c0_i32_39 = arith.constant 0 : i32
    %68 = arith.cmpi ne, %67, %c0_i32_39 : i32
    scf.if %68 {
      %c0_40 = arith.constant 0 : index
      %c0_41 = arith.constant 0 : index
      %69 = vector.load %arg7[%c0_40, %c0_41] : memref<128x128xf32, #tpu.memory_space<vmem>>, vector<128x128xf32>
      %cst_42 = arith.constant dense<0.000000e+00> : vector<128xf32>
      %70 = vector.multi_reduction <add>, %69, %cst_42 [1] : vector<128x128xf32> to vector<128xf32>
      %71 = vector.shape_cast %70 : vector<128xf32> to vector<128x1xf32>
      %c0_43 = arith.constant 0 : index
      %c0_44 = arith.constant 0 : index
      %72 = vector.load %arg8[%c0_43, %c0_44] : memref<128x128xf32, #tpu.memory_space<vmem>>, vector<128x128xf32>
      %cst_45 = arith.constant dense<0.000000e+00> : vector<128xf32>
      %73 = vector.multi_reduction <add>, %72, %cst_45 [1] : vector<128x128xf32> to vector<128xf32>
      %74 = vector.shape_cast %73 : vector<128xf32> to vector<128x1xf32>
      %cst_46 = arith.constant 1.000000e+00 : f32
      %75 = vector.broadcast %cst_46 : f32 to vector<128x1xf32>
      %76 = arith.addf %75, %71 : vector<128x1xf32>
      %77 = math.log %76 : vector<128x1xf32>
      %cst_47 = arith.constant 2.000000e+00 : f32
      %78 = vector.broadcast %cst_47 : f32 to vector<128x1xf32>
      %79 = arith.divf %77, %78 : vector<128x1xf32>
      %cst_48 = arith.constant 1.000000e+00 : f32
      %80 = vector.broadcast %cst_48 : f32 to vector<128x1xf32>
      %81 = arith.addf %80, %74 : vector<128x1xf32>
      %82 = math.log %81 : vector<128x1xf32>
      %cst_49 = arith.constant 5.000000e+01 : f32
      %83 = vector.broadcast %cst_49 : f32 to vector<128x1xf32>
      %84 = arith.divf %82, %83 : vector<128x1xf32>
      %85 = arith.addf %79, %84 : vector<128x1xf32>
      %86 = vector.shape_cast %85 : vector<128x1xf32> to vector<1x128x1xf32>
      %cst_50 = arith.constant dense<0.000000e+00> : vector<1xf32>
      %87 = vector.multi_reduction <add>, %86, %cst_50 [1, 2] : vector<1x128x1xf32> to vector<1xf32>
      %88 = vector.shape_cast %87 : vector<1xf32> to vector<1x1x1xf32>
      %89 = vector.extract %88[0, 0, 0] : f32 from vector<1x1x1xf32>
      %90 = vector.broadcast %89 : f32 to vector<1x1xf32>
      %c0_51 = arith.constant 0 : index
      %c0_52 = arith.constant 0 : index
      %91 = vector.load %arg9[%c0_51, %c0_52] : memref<128x128xf32, #tpu.memory_space<vmem>>, vector<128x128xf32>
      %92 = vector.shape_cast %91 : vector<128x128xf32> to vector<1x128x128xf32>
      %cst_53 = arith.constant dense<0.000000e+00> : vector<1xf32>
      %93 = vector.multi_reduction <add>, %92, %cst_53 [1, 2] : vector<1x128x128xf32> to vector<1xf32>
      %94 = vector.shape_cast %93 : vector<1xf32> to vector<1x1x1xf32>
      %95 = vector.extract %94[0, 0, 0] : f32 from vector<1x1x1xf32>
      %96 = vector.broadcast %95 : f32 to vector<1x1xf32>
      %c0_54 = arith.constant 0 : index
      %c0_55 = arith.constant 0 : index
      %97 = vector.load %arg10[%c0_54, %c0_55] : memref<128x128xf32, #tpu.memory_space<vmem>>, vector<128x128xf32>
      %98 = vector.shape_cast %97 : vector<128x128xf32> to vector<1x128x128xf32>
      %cst_56 = arith.constant dense<0.000000e+00> : vector<1xf32>
      %99 = vector.multi_reduction <add>, %98, %cst_56 [1, 2] : vector<1x128x128xf32> to vector<1xf32>
      %100 = vector.shape_cast %99 : vector<1xf32> to vector<1x1x1xf32>
      %101 = vector.extract %100[0, 0, 0] : f32 from vector<1x1x1xf32>
      %102 = vector.broadcast %101 : f32 to vector<1x1xf32>
      %103 = tpu.iota {dimensions = array<i32: 1>} : vector<8x128xi32>
      %cst_57 = arith.constant 0.000000e+00 : f32
      %104 = vector.broadcast %cst_57 : f32 to vector<8x128xf32>
      %c0_i32_58 = arith.constant 0 : i32
      %105 = vector.broadcast %c0_i32_58 : i32 to vector<8x128xi32>
      %106 = arith.cmpi eq, %103, %105 : vector<8x128xi32>
      %107 = vector.shape_cast %90 : vector<1x1xf32> to vector<1x1xf32>
      %108 = vector.broadcast %107 : vector<1x1xf32> to vector<8x128xf32>
      %109 = arith.select %106, %108, %104 : vector<8x128xi1>, vector<8x128xf32>
      %c1_i32_59 = arith.constant 1 : i32
      %110 = vector.broadcast %c1_i32_59 : i32 to vector<8x128xi32>
      %111 = arith.cmpi eq, %103, %110 : vector<8x128xi32>
      %112 = vector.shape_cast %96 : vector<1x1xf32> to vector<1x1xf32>
      %113 = vector.broadcast %112 : vector<1x1xf32> to vector<8x128xf32>
      %114 = arith.select %111, %113, %109 : vector<8x128xi1>, vector<8x128xf32>
      %c2_i32 = arith.constant 2 : i32
      %115 = vector.broadcast %c2_i32 : i32 to vector<8x128xi32>
      %116 = arith.cmpi eq, %103, %115 : vector<8x128xi32>
      %117 = vector.shape_cast %102 : vector<1x1xf32> to vector<1x1xf32>
      %118 = vector.broadcast %117 : vector<1x1xf32> to vector<8x128xf32>
      %119 = arith.select %116, %118, %114 : vector<8x128xi1>, vector<8x128xf32>
      %c0_60 = arith.constant 0 : index
      %c0_61 = arith.constant 0 : index
      %c0_62 = arith.constant 0 : index
      %120 = vector.load %arg6[%c0_60, %c0_61, %c0_62] : memref<1x8x128xf32, #tpu.memory_space<vmem>>, vector<1x8x128xf32>
      %121 = vector.shape_cast %120 : vector<1x8x128xf32> to vector<8x128xf32>
      %122 = vector.shape_cast %119 : vector<8x128xf32> to vector<1x8x128xf32>
      tpu.vector_store %arg6[%c0_60, %c0_61, %c0_62], %122 {strides = array<i32>} : memref<1x8x128xf32, #tpu.memory_space<vmem>>, vector<1x8x128xf32>,
    } else {
    }
    return
  }
  func.func @transform_0(%arg0: i32, %arg1: i32) -> (i32, i32) {
    %c0_i32 = arith.constant 0 : i32
    %c0_i32_0 = arith.constant 0 : i32
    return %arg0, %c0_i32 : i32, i32
  }
  func.func @transform_1(%arg0: i32, %arg1: i32) -> (i32, i32) {
    %c0_i32 = arith.constant 0 : i32
    %c0_i32_0 = arith.constant 0 : i32
    return %c0_i32, %arg1 : i32, i32
  }
  func.func @transform_2(%arg0: i32, %arg1: i32) -> (i32, i32) {
    %c0_i32 = arith.constant 0 : i32
    %c0_i32_0 = arith.constant 0 : i32
    return %arg0, %c0_i32 : i32, i32
  }
  func.func @transform_3(%arg0: i32, %arg1: i32) -> (i32, i32) {
    %c0_i32 = arith.constant 0 : i32
    %c0_i32_0 = arith.constant 0 : i32
    return %arg1, %c0_i32 : i32, i32
  }
  func.func @transform_4(%arg0: i32, %arg1: i32) -> (i32, i32, i32) {
    %c0_i32 = arith.constant 0 : i32
    %c0_i32_0 = arith.constant 0 : i32
    %c0_i32_1 = arith.constant 0 : i32
    return %arg0, %c0_i32, %c0_i32_0 : i32, i32, i32
  }
}

</mosaic_0001>

<llo_original>
// kernel: tpu_custom_call.1
$region0: #{tpu_custom_call.1}
  #allocation0 [shape = 'u32[]', space=smem, size = 0x4, offset = 0x4, fixed_abs, tag = 'smem constant byte address 0x4 - core index']
  #allocation1 [shape = 'u32[144,128]{1,0:T(1,128)}', space=vmem, size = 0x12000, scoped, tag = 'internal scratch']
  #allocation2 [shape = 'f32[128,128]{1,0:T(8,128)}', space=vmem, size = 0x10000, scoped, tag = 'scratch operand']
  #allocation3 [shape = 'f32[128,128]{1,0:T(8,128)}', space=vmem, size = 0x10000, scoped, tag = 'scratch operand']
  #allocation4 [shape = 'f32[128,128]{1,0:T(8,128)}', space=vmem, size = 0x10000, scoped, tag = 'scratch operand']
  #allocation5 [shape = 'f32[128,128]{1,0:T(8,128)}', space=vmem, size = 0x10000, scoped, tag = 'scratch operand']
  %s0 = inlined_call_operand.vmem [shape: s32[256,1], index: 0, kind: input, shape index: {}]
  %s1 = inlined_call_operand.vmem [shape: s32[1,256], index: 1, kind: input, shape index: {}]
  %s2 = inlined_call_operand.vmem [shape: bf16[256,128], index: 2, kind: input, shape index: {}]
  %s3 = inlined_call_operand.vmem [shape: bf16[256,128], index: 3, kind: input, shape index: {}]
  %s4 = inlined_call_operand.hbm [shape: f32[2,8,128], index: 4, kind: output, shape index: {}]
  %s5 = sld [smem:[#allocation0]]
  $region57: #{tpu_custom_call.1} parent=0
    _
  %s7 = ssub.s32 1, %s5
  %s8 = scalar_select 0, %s7, %s5
  $region1: #{tpu_custom_call.1} parent=0
    #allocation6 [shape = 'u8[8192]{0}', space=vmem, size = 0x2000, scoped, tag = 'output window, operand 0']
    #allocation7 [shape = 's32[2]{0}', space=sflag, size = 0x8, scoped, tag = 'scoped memory for tpu_custom_call.1']
    %9 = vsyncpa [#allocation7], 0
    %s10 = scalar_lea.sflag [#allocation7], 1
    %11 = vsyncpa %s10, 0
    loop: start=0, step=1, limit=6
    $region2: #{tpu_custom_call.1} parent=1 // loop_pre_header
      _
    $region3: #{tpu_custom_call.1} parent=1 // loop_header
      %s13 = sphi 0, %s17
      %p14 = scmp.ge.s32.totalorder %s13, 6
      %s20 = sphi 0, %s32
      %s21 = sphi 0, %s28
      %s22 = sphi 0, %s20
      %s23 = sphi 0, %s21
      %s24 = sphi 0, %s22
      %s25 = sphi 0, %s23
      %s35 = sphi 0, %s37
      %s38 = sphi 0, %s35
      %s39 = sphi 0, %s38
      %s55 = sphi 0, %s39
      %s61 = sphi 0, %s63
      %s64 = sphi 0, %s61
      %s65 = sphi 0, %s64
      %s81 = sphi 0, %s65
      %s87 = sphi 0, %s89
      %s90 = sphi 0, %s87
      %s91 = sphi 0, %s90
      %s107 = sphi 0, %s91
      %s113 = sphi 0, %s115
      %s116 = sphi 0, %s113
      %s117 = sphi 0, %s116
      %s133 = sphi 0, %s117
      %s139 = sphi 0, %s141
      %s142 = sphi 0, %s139
      %s143 = sphi 0, %s142
      %s159 = sphi 0, %s143
    $region4: #{tpu_custom_call.1} parent=1 // loop_header_branch
      %16 = sbr.rel (%p14) target = $region8
    $region5: #{tpu_custom_call.1} parent=1 // loop_body
      %s18 = ssub.s32 %s13, 1
      %s19 = ssub.s32 %s13, 2
      %s26 = sadd.s32 1, %s21
      %p27 = scmp.ge.s32.totalorder %s26, 2
      %s28 = scalar_select %p27, 0, %s26
      %s29 = sadd.s32 1, %s20
      %s30 = scalar_select %p27, %s29, %s20
      %p31 = scmp.ge.s32.totalorder %s30, 2
      %s32 = scalar_select %p31, 0, %s30
      %s33 = ssub.s32 %s20, %s32
      %p34 = scmp.eq.s32.totalorder %s33, 0
      %s36 = sadd.s32 %s35, 1
      %s37 = scalar_select %p34, %s35, %s36
      %p40 = pneg %p34
      %p41 = scmp.eq.s32.totalorder %s13, 3
      %p42 = por %p40, %p41
      %p43 = scmp.ne.s32.totalorder %s35, %s38
      %p44 = scmp.eq.s32.totalorder %s13, 0
      %p45 = por %p43, %p44
      %p46 = scmp.ne.s32.totalorder %s35, %s38
      %p47 = scmp.eq.s32.totalorder %s18, 3
      %p48 = por %p46, %p47
      %p49 = scmp.ne.s32.totalorder %s38, %s39
      %p50 = scmp.eq.s32.totalorder %s18, 0
      %p51 = por %p49, %p50
      %p52 = scmp.ne.s32.totalorder %s38, %s39
      %p53 = scmp.eq.s32.totalorder %s19, 3
      %p54 = por %p52, %p53
      %p56 = scmp.ne.s32.totalorder %s39, %s55
      %p57 = scmp.eq.s32.totalorder %s19, 0
      %p58 = por %p56, %p57
      %s59 = ssub.s32 %s21, %s28
      %p60 = scmp.eq.s32.totalorder %s59, 0
      %s62 = sadd.s32 %s61, 1
      %s63 = scalar_select %p60, %s61, %s62
      %p66 = pneg %p60
      %p67 = scmp.eq.s32.totalorder %s13, 3
      %p68 = por %p66, %p67
      %p69 = scmp.ne.s32.totalorder %s61, %s64
      %p70 = scmp.eq.s32.totalorder %s13, 0
      %p71 = por %p69, %p70
      %p72 = scmp.ne.s32.totalorder %s61, %s64
      %p73 = scmp.eq.s32.totalorder %s18, 3
      %p74 = por %p72, %p73
      %p75 = scmp.ne.s32.totalorder %s64, %s65
      %p76 = scmp.eq.s32.totalorder %s18, 0
      %p77 = por %p75, %p76
      %p78 = scmp.ne.s32.totalorder %s64, %s65
      %p79 = scmp.eq.s32.totalorder %s19, 3
      %p80 = por %p78, %p79
      %p82 = scmp.ne.s32.totalorder %s65, %s81
      %p83 = scmp.eq.s32.totalorder %s19, 0
      %p84 = por %p82, %p83
      %s85 = ssub.s32 %s20, %s32
      %p86 = scmp.eq.s32.totalorder %s85, 0
      %s88 = sadd.s32 %s87, 1
      %s89 = scalar_select %p86, %s87, %s88
      %p92 = pneg %p86
      %p93 = scmp.eq.s32.totalorder %s13, 3
      %p94 = por %p92, %p93
      %p95 = scmp.ne.s32.totalorder %s87, %s90
      %p96 = scmp.eq.s32.totalorder %s13, 0
      %p97 = por %p95, %p96
      %p98 = scmp.ne.s32.totalorder %s87, %s90
      %p99 = scmp.eq.s32.totalorder %s18, 3
      %p100 = por %p98, %p99
      %p101 = scmp.ne.s32.totalorder %s90, %s91
      %p102 = scmp.eq.s32.totalorder %s18, 0
      %p103 = por %p101, %p102
      %p104 = scmp.ne.s32.totalorder %s90, %s91
      %p105 = scmp.eq.s32.totalorder %s19, 3
      %p106 = por %p104, %p105
      %p108 = scmp.ne.s32.totalorder %s91, %s107
      %p109 = scmp.eq.s32.totalorder %s19, 0
      %p110 = por %p108, %p109
      %s111 = ssub.s32 %s21, %s28
      %p112 = scmp.eq.s32.totalorder %s111, 0
      %s114 = sadd.s32 %s113, 1
      %s115 = scalar_select %p112, %s113, %s114
      %p118 = pneg %p112
      %p119 = scmp.eq.s32.totalorder %s13, 3
      %p120 = por %p118, %p119
      %p121 = scmp.ne.s32.totalorder %s113, %s116
      %p122 = scmp.eq.s32.totalorder %s13, 0
      %p123 = por %p121, %p122
      %p124 = scmp.ne.s32.totalorder %s113, %s116
      %p125 = scmp.eq.s32.totalorder %s18, 3
      %p126 = por %p124, %p125
      %p127 = scmp.ne.s32.totalorder %s116, %s117
      %p128 = scmp.eq.s32.totalorder %s18, 0
      %p129 = por %p127, %p128
      %p130 = scmp.ne.s32.totalorder %s116, %s117
      %p131 = scmp.eq.s32.totalorder %s19, 3
      %p132 = por %p130, %p131
      %p134 = scmp.ne.s32.totalorder %s117, %s133
      %p135 = scmp.eq.s32.totalorder %s19, 0
      %p136 = por %p134, %p135
      %s137 = ssub.s32 %s20, %s32
      %p138 = scmp.eq.s32.totalorder %s137, 0
      %s140 = sadd.s32 %s139, 1
      %s141 = scalar_select %p138, %s139, %s140
      %p144 = pneg %p138
      %p145 = scmp.eq.s32.totalorder %s13, 3
      %p146 = por %p144, %p145
      %p147 = scmp.ne.s32.totalorder %s139, %s142
      %p148 = scmp.eq.s32.totalorder %s13, 0
      %p149 = por %p147, %p148
      %p150 = scmp.ne.s32.totalorder %s139, %s142
      %p151 = scmp.eq.s32.totalorder %s18, 3
      %p152 = por %p150, %p151
      %p153 = scmp.ne.s32.totalorder %s142, %s143
      %p154 = scmp.eq.s32.totalorder %s18, 0
      %p155 = por %p153, %p154
      %p156 = scmp.ne.s32.totalorder %s142, %s143
      %p157 = scmp.eq.s32.totalorder %s19, 3
      %p158 = por %p156, %p157
      %p160 = scmp.ne.s32.totalorder %s143, %s159
      %p161 = scmp.eq.s32.totalorder %s19, 0
      %p162 = por %p160, %p161
      %p163 = scmp.le.s32.totalorder 1, %s13
      %p164 = scmp.lt.s32.totalorder %s13, 5
      %p165 = pnand %p163, %p164
      %p166 = pneg %p165
      // Predicated region
      $region9: #{tpu_custom_call.1} parent=5 // pred_check
        _
      $region10: #{tpu_custom_call.1} parent=5 // pred_check_branch
        %168 = sbr.rel (%p165) target = $region12
      $region11: #{tpu_custom_call.1} parent=5 // pred_region
        %s169 = ssub.s32 %s13, 1
      $region12: #{tpu_custom_call.1} parent=5 // pred_fallthru
        _
      %p170 = scmp.lt.s32.totalorder %s13, 4
      // Predicated region
      $region13: #{tpu_custom_call.1} parent=5 // pred_check
        %p171 = pneg %p170
      $region14: #{tpu_custom_call.1} parent=5 // pred_check_branch
        %173 = sbr.rel (%p171) target = $region16
      $region15: #{tpu_custom_call.1} parent=5 // pred_region
        // Predicated region
        $region17: #{tpu_custom_call.1} parent=15 // pred_check
          %p174 = pneg %p45
        $region18: #{tpu_custom_call.1} parent=15 // pred_check_branch
          %176 = sbr.rel (%p174) target = $region20
        $region19: #{tpu_custom_call.1} parent=15 // pred_region
          %s177 = smul.u32 16, %s20
          %p178 = scmp.lt.s32.totalorder %s177, 31
          %s179 = scalar_select %p178, %s177, 31
          %s180 = smul.addr %s179, 8
          %s181 = scalar_lea.vmem %s0, %s180
          %s182 = smul.u32 16, %s20
        $region20: #{tpu_custom_call.1} parent=15 // pred_fallthru
          _
        // Predicated region
        $region21: #{tpu_custom_call.1} parent=15 // pred_check
          %p183 = pneg %p71
        $region22: #{tpu_custom_call.1} parent=15 // pred_check_branch
          %185 = sbr.rel (%p183) target = $region24
        $region23: #{tpu_custom_call.1} parent=15 // pred_region
          %p186 = scmp.lt.s32.totalorder %s21, 1
          %s187 = scalar_select %p186, %s21, 1
          %s188 = scalar_lea.vmem %s1, %s187
        $region24: #{tpu_custom_call.1} parent=15 // pred_fallthru
          _
        // Predicated region
        $region25: #{tpu_custom_call.1} parent=15 // pred_check
          %p189 = pneg %p97
        $region26: #{tpu_custom_call.1} parent=15 // pred_check_branch
          %191 = sbr.rel (%p189) target = $region28
        $region27: #{tpu_custom_call.1} parent=15 // pred_region
          %s192 = smul.u32 16, %s20
          %p193 = scmp.lt.s32.totalorder %s192, 31
          %s194 = scalar_select %p193, %s192, 31
          %s195 = smul.addr %s194, 4
          %s196 = scalar_lea.vmem %s2, %s195
          %s197 = smul.u32 16, %s20
        $region28: #{tpu_custom_call.1} parent=15 // pred_fallthru
          _
        // Predicated region
        $region29: #{tpu_custom_call.1} parent=15 // pred_check
          %p198 = pneg %p123
        $region30: #{tpu_custom_call.1} parent=15 // pred_check_branch
          %200 = sbr.rel (%p198) target = $region32
        $region31: #{tpu_custom_call.1} parent=15 // pred_region
          %s201 = smul.u32 16, %s21
          %p202 = scmp.lt.s32.totalorder %s201, 31
          %s203 = scalar_select %p202, %s201, 31
          %s204 = smul.addr %s203, 4
          %s205 = scalar_lea.vmem %s3, %s204
          %s206 = smul.u32 16, %s21
        $region32: #{tpu_custom_call.1} parent=15 // pred_fallthru
          _
      $region16: #{tpu_custom_call.1} parent=5 // pred_fallthru
        _
      %p207 = scmp.le.s32.totalorder 1, %s13
      %p208 = scmp.lt.s32.totalorder %s13, 5
      %p209 = pnand %p207, %p208
      %p210 = pneg %p209
      // Predicated region
      $region33: #{tpu_custom_call.1} parent=5 // pred_check
        _
      $region34: #{tpu_custom_call.1} parent=5 // pred_check_branch
        %212 = sbr.rel (%p209) target = $region36
      $region35: #{tpu_custom_call.1} parent=5 // pred_region
        %s213 = ssub.s32 %s13, 1
        %s214 = smul.u32 16, %s22
        %p215 = scmp.lt.s32.totalorder %s214, 31
        %s216 = scalar_select %p215, %s214, 31
        %s217 = smul.addr %s216, 8
        %s218 = scalar_lea.vmem %s0, %s217
        %p219 = pneg %p51
        %p220 = pneg %p48
        %p221 = scmp.lt.s32.totalorder %s23, 1
        %s222 = scalar_select %p221, %s23, 1
        %s223 = scalar_lea.vmem %s1, %s222
        %p224 = pneg %p77
        %p225 = pneg %p74
        %s226 = smul.u32 16, %s22
        %p227 = scmp.lt.s32.totalorder %s226, 31
        %s228 = scalar_select %p227, %s226, 31
        %s229 = smul.addr %s228, 4
        %s230 = scalar_lea.vmem %s2, %s229
        %p231 = pneg %p103
        %p232 = pneg %p100
        %s233 = smul.u32 16, %s23
        %p234 = scmp.lt.s32.totalorder %s233, 31
        %s235 = scalar_select %p234, %s233, 31
        %s236 = smul.addr %s235, 4
        %s237 = scalar_lea.vmem %s3, %s236
        %p238 = pneg %p129
        %p239 = pneg %p126
        %p240 = pneg %p155
        %p241 = pneg %p152
        %s242 = sand.u32 %s142, 1
        %s243 = scalar_lea.sflag [#allocation7], %s242
        %s244 = sand.u32 %s142, 1
        %s245 = smul.addr %s244, 8
        %s246 = scalar_lea.vmem [#allocation6], %s245
        %s247 = smul.u32 16, %s22
        %p248 = scmp.lt.s32.totalorder %s247, 31
        %s249 = scalar_select %p248, %s247, 31
        %s250 = smul.addr %s249, 8
        %s251 = scalar_lea.vmem %s0, %s250
        %s252 = smul.u32 16, %s22
        %p253 = scmp.lt.s32.totalorder %s23, 1
        %s254 = scalar_select %p253, %s23, 1
        %s255 = scalar_lea.vmem %s1, %s254
        %s256 = smul.u32 16, %s22
        %p257 = scmp.lt.s32.totalorder %s256, 31
        %s258 = scalar_select %p257, %s256, 31
        %s259 = smul.addr %s258, 4
        %s260 = scalar_lea.vmem %s2, %s259
        %s261 = smul.u32 16, %s22
        %s262 = smul.u32 16, %s23
        %p263 = scmp.lt.s32.totalorder %s262, 31
        %s264 = scalar_select %p263, %s262, 31
        %s265 = smul.addr %s264, 4
        %s266 = scalar_lea.vmem %s3, %s265
        %s267 = smul.u32 16, %s23
        %p269 = scmp.eq.s32.totalorder %s23, 0
        // Predicated region
        $region37: #{tpu_custom_call.1} parent=35 // pred_check
          %p270 = pneg %p269
        $region38: #{tpu_custom_call.1} parent=35 // pred_check_branch
          %272 = sbr.rel (%p270) target = $region40
        $region39: #{tpu_custom_call.1} parent=35 // pred_region
          %273 = vst [vmem:[#allocation2] sm:$0xff] 0.0
          %274 = vst [vmem:[#allocation2 + $0x8] sm:$0xff] 0.0
          %275 = vst [vmem:[#allocation2 + $0x10] sm:$0xff] 0.0
          %276 = vst [vmem:[#allocation2 + $0x18] sm:$0xff] 0.0
          %277 = vst [vmem:[#allocation2 + $0x20] sm:$0xff] 0.0
          %278 = vst [vmem:[#allocation2 + $0x28] sm:$0xff] 0.0
          %279 = vst [vmem:[#allocation2 + $0x30] sm:$0xff] 0.0
          %280 = vst [vmem:[#allocation2 + $0x38] sm:$0xff] 0.0
          %281 = vst [vmem:[#allocation2 + $0x40] sm:$0xff] 0.0
          %282 = vst [vmem:[#allocation2 + $0x48] sm:$0xff] 0.0
          %283 = vst [vmem:[#allocation2 + $0x50] sm:$0xff] 0.0
          %284 = vst [vmem:[#allocation2 + $0x58] sm:$0xff] 0.0
          %285 = vst [vmem:[#allocation2 + $0x60] sm:$0xff] 0.0
          %286 = vst [vmem:[#allocation2 + $0x68] sm:$0xff] 0.0
          %287 = vst [vmem:[#allocation2 + $0x70] sm:$0xff] 0.0
          %288 = vst [vmem:[#allocation2 + $0x78] sm:$0xff] 0.0
          %289 = vst [vmem:[#allocation3] sm:$0xff] 0.0
          %290 = vst [vmem:[#allocation3 + $0x8] sm:$0xff] 0.0
          %291 = vst [vmem:[#allocation3 + $0x10] sm:$0xff] 0.0
          %292 = vst [vmem:[#allocation3 + $0x18] sm:$0xff] 0.0
          %293 = vst [vmem:[#allocation3 + $0x20] sm:$0xff] 0.0
          %294 = vst [vmem:[#allocation3 + $0x28] sm:$0xff] 0.0
          %295 = vst [vmem:[#allocation3 + $0x30] sm:$0xff] 0.0
          %296 = vst [vmem:[#allocation3 + $0x38] sm:$0xff] 0.0
          %297 = vst [vmem:[#allocation3 + $0x40] sm:$0xff] 0.0
          %298 = vst [vmem:[#allocation3 + $0x48] sm:$0xff] 0.0
          %299 = vst [vmem:[#allocation3 + $0x50] sm:$0xff] 0.0
          %300 = vst [vmem:[#allocation3 + $0x58] sm:$0xff] 0.0
          %301 = vst [vmem:[#allocation3 + $0x60] sm:$0xff] 0.0
          %302 = vst [vmem:[#allocation3 + $0x68] sm:$0xff] 0.0
          %303 = vst [vmem:[#allocation3 + $0x70] sm:$0xff] 0.0
          %304 = vst [vmem:[#allocation3 + $0x78] sm:$0xff] 0.0
          %305 = vst [vmem:[#allocation4] sm:$0xff] 0.0
          %306 = vst [vmem:[#allocation4 + $0x8] sm:$0xff] 0.0
          %307 = vst [vmem:[#allocation4 + $0x10] sm:$0xff] 0.0
          %308 = vst [vmem:[#allocation4 + $0x18] sm:$0xff] 0.0
          %309 = vst [vmem:[#allocation4 + $0x20] sm:$0xff] 0.0
          %310 = vst [vmem:[#allocation4 + $0x28] sm:$0xff] 0.0
          %311 = vst [vmem:[#allocation4 + $0x30] sm:$0xff] 0.0
          %312 = vst [vmem:[#allocation4 + $0x38] sm:$0xff] 0.0
          %313 = vst [vmem:[#allocation4 + $0x40] sm:$0xff] 0.0
          %314 = vst [vmem:[#allocation4 + $0x48] sm:$0xff] 0.0
          %315 = vst [vmem:[#allocation4 + $0x50] sm:$0xff] 0.0
          %316 = vst [vmem:[#allocation4 + $0x58] sm:$0xff] 0.0
          %317 = vst [vmem:[#allocation4 + $0x60] sm:$0xff] 0.0
          %318 = vst [vmem:[#allocation4 + $0x68] sm:$0xff] 0.0
          %319 = vst [vmem:[#allocation4 + $0x70] sm:$0xff] 0.0
          %320 = vst [vmem:[#allocation4 + $0x78] sm:$0xff] 0.0
          %321 = vst [vmem:[#allocation5] sm:$0xff] 0.0
          %322 = vst [vmem:[#allocation5 + $0x8] sm:$0xff] 0.0
          %323 = vst [vmem:[#allocation5 + $0x10] sm:$0xff] 0.0
          %324 = vst [vmem:[#allocation5 + $0x18] sm:$0xff] 0.0
          %325 = vst [vmem:[#allocation5 + $0x20] sm:$0xff] 0.0
          %326 = vst [vmem:[#allocation5 + $0x28] sm:$0xff] 0.0
          %327 = vst [vmem:[#allocation5 + $0x30] sm:$0xff] 0.0
          %328 = vst [vmem:[#allocation5 + $0x38] sm:$0xff] 0.0
          %329 = vst [vmem:[#allocation5 + $0x40] sm:$0xff] 0.0
          %330 = vst [vmem:[#allocation5 + $0x48] sm:$0xff] 0.0
          %331 = vst [vmem:[#allocation5 + $0x50] sm:$0xff] 0.0
          %332 = vst [vmem:[#allocation5 + $0x58] sm:$0xff] 0.0
          %333 = vst [vmem:[#allocation5 + $0x60] sm:$0xff] 0.0
          %334 = vst [vmem:[#allocation5 + $0x68] sm:$0xff] 0.0
          %335 = vst [vmem:[#allocation5 + $0x70] sm:$0xff] 0.0
          %336 = vst [vmem:[#allocation5 + $0x78] sm:$0xff] 0.0
        $region40: #{tpu_custom_call.1} parent=35 // pred_fallthru
          _
        %v337 = vld [vmem:[%s260] sm:$0xf]
        %v338 = vld [vmem:[%s260 + $0x4] sm:$0xf]
        %v339 = vld [vmem:[%s260 + $0x8] sm:$0xf]
        %v340 = vld [vmem:[%s260 + $0xc] sm:$0xf]
        %v341 = vld [vmem:[%s260 + $0x10] sm:$0xf]
        %v342 = vld [vmem:[%s260 + $0x14] sm:$0xf]
        %v343 = vld [vmem:[%s260 + $0x18] sm:$0xf]
        %v344 = vld [vmem:[%s260 + $0x1c] sm:$0xf]
        %v345 = vld [vmem:[%s260 + $0x20] sm:$0xf]
        %v346 = vld [vmem:[%s260 + $0x24] sm:$0xf]
        %v347 = vld [vmem:[%s260 + $0x28] sm:$0xf]
        %v348 = vld [vmem:[%s260 + $0x2c] sm:$0xf]
        %v349 = vld [vmem:[%s260 + $0x30] sm:$0xf]
        %v350 = vld [vmem:[%s260 + $0x34] sm:$0xf]
        %v351 = vld [vmem:[%s260 + $0x38] sm:$0xf]
        %v352 = vld [vmem:[%s260 + $0x3c] sm:$0xf]
        %v353 = vld [vmem:[%s266] sm:$0xf]
        %v354 = vld [vmem:[%s266 + $0x4] sm:$0xf]
        %v355 = vld [vmem:[%s266 + $0x8] sm:$0xf]
        %v356 = vld [vmem:[%s266 + $0xc] sm:$0xf]
        %v357 = vld [vmem:[%s266 + $0x10] sm:$0xf]
        %v358 = vld [vmem:[%s266 + $0x14] sm:$0xf]
        %v359 = vld [vmem:[%s266 + $0x18] sm:$0xf]
        %v360 = vld [vmem:[%s266 + $0x1c] sm:$0xf]
        %v361 = vld [vmem:[%s266 + $0x20] sm:$0xf]
        %v362 = vld [vmem:[%s266 + $0x24] sm:$0xf]
        %v363 = vld [vmem:[%s266 + $0x28] sm:$0xf]
        %v364 = vld [vmem:[%s266 + $0x2c] sm:$0xf]
        %v365 = vld [vmem:[%s266 + $0x30] sm:$0xf]
        %v366 = vld [vmem:[%s266 + $0x34] sm:$0xf]
        %v367 = vld [vmem:[%s266 + $0x38] sm:$0xf]
        %v368 = vld [vmem:[%s266 + $0x3c] sm:$0xf]
        %v385 = vunpack.c.l.b16 %v337
        %v386 = vunpack.c.l.b16 %v338
        %v387 = vunpack.c.l.b16 %v339
        %v388 = vunpack.c.l.b16 %v340
        %v389 = vunpack.c.l.b16 %v341
        %v390 = vunpack.c.l.b16 %v342
        %v391 = vunpack.c.l.b16 %v343
        %v392 = vunpack.c.l.b16 %v344
        %v393 = vunpack.c.l.b16 %v345
        %v394 = vunpack.c.l.b16 %v346
        %v395 = vunpack.c.l.b16 %v347
        %v396 = vunpack.c.l.b16 %v348
        %v397 = vunpack.c.l.b16 %v349
        %v398 = vunpack.c.l.b16 %v350
        %v399 = vunpack.c.l.b16 %v351
        %v400 = vunpack.c.l.b16 %v352
        %v401 = vpack.c.b16 %v386, %v385
        %v402 = vpack.c.b16 %v388, %v387
        %v403 = vpack.c.b16 %v390, %v389
        %v404 = vpack.c.b16 %v392, %v391
        %v405 = vpack.c.b16 %v394, %v393
        %v406 = vpack.c.b16 %v396, %v395
        %v407 = vpack.c.b16 %v398, %v397
        %v408 = vpack.c.b16 %v400, %v399
        %v433 = vunpack.c.l.b16 %v353
        %v434 = vunpack.c.l.b16 %v354
        %v435 = vunpack.c.l.b16 %v355
        %v436 = vunpack.c.l.b16 %v356
        %v437 = vunpack.c.l.b16 %v357
        %v438 = vunpack.c.l.b16 %v358
        %v439 = vunpack.c.l.b16 %v359
        %v440 = vunpack.c.l.b16 %v360
        %v441 = vunpack.c.l.b16 %v361
        %v442 = vunpack.c.l.b16 %v362
        %v443 = vunpack.c.l.b16 %v363
        %v444 = vunpack.c.l.b16 %v364
        %v445 = vunpack.c.l.b16 %v365
        %v446 = vunpack.c.l.b16 %v366
        %v447 = vunpack.c.l.b16 %v367
        %v448 = vunpack.c.l.b16 %v368
        %v449 = vpack.c.b16 %v434, %v433
        %v450 = vpack.c.b16 %v436, %v435
        %v451 = vpack.c.b16 %v438, %v437
        %v452 = vpack.c.b16 %v440, %v439
        %v453 = vpack.c.b16 %v442, %v441
        %v454 = vpack.c.b16 %v444, %v443
        %v455 = vpack.c.b16 %v446, %v445
        %v456 = vpack.c.b16 %v448, %v447
        %465 = vmatprep.subr.bf16.mxu0 0
        %466 = vmatpush1.bf16.xpose.msra.mxu0 %v449
        %467 = vmatprep.subr.bf16.mxu0 0
        %468 = vmatpush1.bf16.xpose.msra.mxu0 %v450
        %469 = vmatprep.subr.bf16.mxu0 0
        %470 = vmatpush1.bf16.xpose.msra.mxu0 %v451
        %471 = vmatprep.subr.bf16.mxu0 0
        %472 = vmatpush1.bf16.xpose.msra.mxu0 %v452
        %473 = vmatprep.subr.bf16.mxu0 0
        %474 = vmatpush1.bf16.xpose.msra.mxu0 %v453
        %475 = vmatprep.subr.bf16.mxu0 0
        %476 = vmatpush1.bf16.xpose.msra.mxu0 %v454
        %477 = vmatprep.subr.bf16.mxu0 0
        %478 = vmatpush1.bf16.xpose.msra.mxu0 %v455
        %479 = vmatprep.subr.bf16.mxu0 0
        %480 = vmatpush1.bf16.xpose.msra.mxu0 %v456
        %481 = vmatprep.subr.bf16.mxu0 0
        %482 = vmatpush1.bf16.xpose.msra.mxu0 0
        %483 = vmatprep.subr.bf16.mxu0 0
        %484 = vmatpush1.bf16.xpose.msra.mxu0 0
        %485 = vmatprep.subr.bf16.mxu0 0
        %486 = vmatpush1.bf16.xpose.msra.mxu0 0
        %487 = vmatprep.subr.bf16.mxu0 0
        %488 = vmatpush1.bf16.xpose.msra.mxu0 0
        %489 = vmatprep.subr.bf16.mxu0 0
        %490 = vmatpush1.bf16.xpose.msra.mxu0 0
        %491 = vmatprep.subr.bf16.mxu0 0
        %492 = vmatpush1.bf16.xpose.msra.mxu0 0
        %493 = vmatprep.subr.bf16.mxu0 0
        %494 = vmatpush1.bf16.xpose.msra.mxu0 0
        %495 = vmatprep.subr.bf16.mxu0 0
        %496 = vmatpush1.bf16.xpose.msra.mxu0 0
        %497 = vmatprep.mubr.bf16.mxu0 0
        %498 = vmatmul.mubr.bf16.gmra.mrb[0].mxu0 %v401
        %v499 = vpop.f32.mrb[0].mxu0
        %v500 = vadd.f32 0.0, %v499
        %v501 = vpop.f32.mrb[0].mxu0
        %v502 = vpop.f32.mrb[0].mxu0
        %v503 = vadd.f32 0.0, %v502
        %v504 = vpop.f32.mrb[0].mxu0
        %505 = vmatprep.mubr.bf16.mxu0 0
        %506 = vmatmul.mubr.bf16.gmra.mrb[0].mxu0 %v402
        %v507 = vpop.f32.mrb[0].mxu0
        %v508 = vadd.f32 0.0, %v507
        %v509 = vpop.f32.mrb[0].mxu0
        %v510 = vpop.f32.mrb[0].mxu0
        %v511 = vadd.f32 0.0, %v510
        %v512 = vpop.f32.mrb[0].mxu0
        %513 = vmatprep.mubr.bf16.mxu0 0
        %514 = vmatmul.mubr.bf16.gmra.mrb[0].mxu0 %v403
        %v515 = vpop.f32.mrb[0].mxu0
        %v516 = vadd.f32 0.0, %v515
        %v517 = vpop.f32.mrb[0].mxu0
        %v518 = vpop.f32.mrb[0].mxu0
        %v519 = vadd.f32 0.0, %v518
        %v520 = vpop.f32.mrb[0].mxu0
        %521 = vmatprep.mubr.bf16.mxu0 0
        %522 = vmatmul.mubr.bf16.gmra.mrb[0].mxu0 %v404
        %v523 = vpop.f32.mrb[0].mxu0
        %v524 = vadd.f32 0.0, %v523
        %v525 = vpop.f32.mrb[0].mxu0
        %v526 = vpop.f32.mrb[0].mxu0
        %v527 = vadd.f32 0.0, %v526
        %v528 = vpop.f32.mrb[0].mxu0
        %529 = vmatprep.mubr.bf16.mxu0 0
        %530 = vmatmul.mubr.bf16.gmra.mrb[0].mxu0 %v405
        %v531 = vpop.f32.mrb[0].mxu0
        %v532 = vadd.f32 0.0, %v531
        %v533 = vpop.f32.mrb[0].mxu0
        %v534 = vpop.f32.mrb[0].mxu0
        %v535 = vadd.f32 0.0, %v534
        %v536 = vpop.f32.mrb[0].mxu0
        %537 = vmatprep.mubr.bf16.mxu0 0
        %538 = vmatmul.mubr.bf16.gmra.mrb[0].mxu0 %v406
        %v539 = vpop.f32.mrb[0].mxu0
        %v540 = vadd.f32 0.0, %v539
        %v541 = vpop.f32.mrb[0].mxu0
        %v542 = vpop.f32.mrb[0].mxu0
        %v543 = vadd.f32 0.0, %v542
        %v544 = vpop.f32.mrb[0].mxu0
        %545 = vmatprep.mubr.bf16.mxu0 0
        %546 = vmatmul.mubr.bf16.gmra.mrb[0].mxu0 %v407
        %v547 = vpop.f32.mrb[0].mxu0
        %v548 = vadd.f32 0.0, %v547
        %v549 = vpop.f32.mrb[0].mxu0
        %v550 = vpop.f32.mrb[0].mxu0
        %v551 = vadd.f32 0.0, %v550
        %v552 = vpop.f32.mrb[0].mxu0
        %553 = vmatprep.mubr.bf16.mxu0 0
        %554 = vmatmul.mubr.bf16.gmra.mrb[0].mxu0 %v408
        %v555 = vpop.f32.mrb[0].mxu0
        %v556 = vadd.f32 0.0, %v555
        %v557 = vpop.f32.mrb[0].mxu0
        %v558 = vpop.f32.mrb[0].mxu0
        %v559 = vadd.f32 0.0, %v558
        %v560 = vpop.f32.mrb[0].mxu0
        %561 = vdwg.mxu0
        %v562 = vld [vmem:[%s251] sm:$0xff]
        %v563 = vld [vmem:[%s251 + $0x8] sm:$0xff]
        %v564 = vld [vmem:[%s251 + $0x10] sm:$0xff]
        %v565 = vld [vmem:[%s251 + $0x18] sm:$0xff]
        %v566 = vld [vmem:[%s251 + $0x20] sm:$0xff]
        %v567 = vld [vmem:[%s251 + $0x28] sm:$0xff]
        %v568 = vld [vmem:[%s251 + $0x30] sm:$0xff]
        %v569 = vld [vmem:[%s251 + $0x38] sm:$0xff]
        %v570 = vld [vmem:[%s251 + $0x40] sm:$0xff]
        %v571 = vld [vmem:[%s251 + $0x48] sm:$0xff]
        %v572 = vld [vmem:[%s251 + $0x50] sm:$0xff]
        %v573 = vld [vmem:[%s251 + $0x58] sm:$0xff]
        %v574 = vld [vmem:[%s251 + $0x60] sm:$0xff]
        %v575 = vld [vmem:[%s251 + $0x68] sm:$0xff]
        %v576 = vld [vmem:[%s251 + $0x70] sm:$0xff]
        %v577 = vld [vmem:[%s251 + $0x78] sm:$0xff]
        %v578 = vld [vmem:[%s255] sm:$0x1]
        %579 = vset.pattern.permute.xlu0 0
        %580 = vperm.xlu0 %579, %v562
        %v581 = vpop.permute.xlu0 %580
        %582 = vset.pattern.permute.xlu0 0
        %583 = vperm.xlu0 %582, %v563
        %v584 = vpop.permute.xlu0 %583
        %585 = vset.pattern.permute.xlu0 0
        %586 = vperm.xlu0 %585, %v564
        %v587 = vpop.permute.xlu0 %586
        %588 = vset.pattern.permute.xlu0 0
        %589 = vperm.xlu0 %588, %v565
        %v590 = vpop.permute.xlu0 %589
        %591 = vset.pattern.permute.xlu0 0
        %592 = vperm.xlu0 %591, %v566
        %v593 = vpop.permute.xlu0 %592
        %594 = vset.pattern.permute.xlu0 0
        %595 = vperm.xlu0 %594, %v567
        %v596 = vpop.permute.xlu0 %595
        %597 = vset.pattern.permute.xlu0 0
        %598 = vperm.xlu0 %597, %v568
        %v599 = vpop.permute.xlu0 %598
        %600 = vset.pattern.permute.xlu0 0
        %601 = vperm.xlu0 %600, %v569
        %v602 = vpop.permute.xlu0 %601
        %603 = vset.pattern.permute.xlu0 0
        %604 = vperm.xlu0 %603, %v570
        %v605 = vpop.permute.xlu0 %604
        %606 = vset.pattern.permute.xlu0 0
        %607 = vperm.xlu0 %606, %v571
        %v608 = vpop.permute.xlu0 %607
        %609 = vset.pattern.permute.xlu0 0
        %610 = vperm.xlu0 %609, %v572
        %v611 = vpop.permute.xlu0 %610
        %612 = vset.pattern.permute.xlu0 0
        %613 = vperm.xlu0 %612, %v573
        %v614 = vpop.permute.xlu0 %613
        %615 = vset.pattern.permute.xlu0 0
        %616 = vperm.xlu0 %615, %v574
        %v617 = vpop.permute.xlu0 %616
        %618 = vset.pattern.permute.xlu0 0
        %619 = vperm.xlu0 %618, %v575
        %v620 = vpop.permute.xlu0 %619
        %621 = vset.pattern.permute.xlu0 0
        %622 = vperm.xlu0 %621, %v576
        %v623 = vpop.permute.xlu0 %622
        %624 = vset.pattern.permute.xlu0 0
        %625 = vperm.xlu0 %624, %v577
        %v626 = vpop.permute.xlu0 %625
        %v627 = vlaneseq
        %v628 = vshrl.u32 %v627, 7
        %v629 = vsub.s32 0, %v628
        %v630 = vrot.slane %v578, %v629
        %vm631 = vcmp.eq.s32.totalorder %v581, %v630
        %vm632 = vcmp.eq.s32.totalorder %v584, %v630
        %vm633 = vcmp.eq.s32.totalorder %v587, %v630
        %vm634 = vcmp.eq.s32.totalorder %v590, %v630
        %vm635 = vcmp.eq.s32.totalorder %v593, %v630
        %vm636 = vcmp.eq.s32.totalorder %v596, %v630
        %vm637 = vcmp.eq.s32.totalorder %v599, %v630
        %vm638 = vcmp.eq.s32.totalorder %v602, %v630
        %vm639 = vcmp.eq.s32.totalorder %v605, %v630
        %vm640 = vcmp.eq.s32.totalorder %v608, %v630
        %vm641 = vcmp.eq.s32.totalorder %v611, %v630
        %vm642 = vcmp.eq.s32.totalorder %v614, %v630
        %vm643 = vcmp.eq.s32.totalorder %v617, %v630
        %vm644 = vcmp.eq.s32.totalorder %v620, %v630
        %vm645 = vcmp.eq.s32.totalorder %v623, %v630
        %vm646 = vcmp.eq.s32.totalorder %v626, %v630
        %vm647 = vcmp.ge.s32.totalorder %v562, 0
        %vm648 = vcmp.ge.s32.totalorder %v563, 0
        %vm649 = vcmp.ge.s32.totalorder %v564, 0
        %vm650 = vcmp.ge.s32.totalorder %v565, 0
        %vm651 = vcmp.ge.s32.totalorder %v566, 0
        %vm652 = vcmp.ge.s32.totalorder %v567, 0
        %vm653 = vcmp.ge.s32.totalorder %v568, 0
        %vm654 = vcmp.ge.s32.totalorder %v569, 0
        %vm655 = vcmp.ge.s32.totalorder %v570, 0
        %vm656 = vcmp.ge.s32.totalorder %v571, 0
        %vm657 = vcmp.ge.s32.totalorder %v572, 0
        %vm658 = vcmp.ge.s32.totalorder %v573, 0
        %vm659 = vcmp.ge.s32.totalorder %v574, 0
        %vm660 = vcmp.ge.s32.totalorder %v575, 0
        %vm661 = vcmp.ge.s32.totalorder %v576, 0
        %vm662 = vcmp.ge.s32.totalorder %v577, 0
        %vm663 = vcmp.ge.s32.totalorder %v578, 0
        %v664 = vsel %vm647, 1, 0
        %v665 = vsel %vm648, 1, 0
        %v666 = vsel %vm649, 1, 0
        %v667 = vsel %vm650, 1, 0
        %v668 = vsel %vm651, 1, 0
        %v669 = vsel %vm652, 1, 0
        %v670 = vsel %vm653, 1, 0
        %v671 = vsel %vm654, 1, 0
        %v672 = vsel %vm655, 1, 0
        %v673 = vsel %vm656, 1, 0
        %v674 = vsel %vm657, 1, 0
        %v675 = vsel %vm658, 1, 0
        %v676 = vsel %vm659, 1, 0
        %v677 = vsel %vm660, 1, 0
        %v678 = vsel %vm661, 1, 0
        %v679 = vsel %vm662, 1, 0
        %680 = vset.pattern.permute.xlu0 0
        %681 = vperm.xlu0 %680, %v664
        %v682 = vpop.permute.xlu0 %681
        %683 = vset.pattern.permute.xlu0 0
        %684 = vperm.xlu0 %683, %v665
        %v685 = vpop.permute.xlu0 %684
        %686 = vset.pattern.permute.xlu0 0
        %687 = vperm.xlu0 %686, %v666
        %v688 = vpop.permute.xlu0 %687
        %689 = vset.pattern.permute.xlu0 0
        %690 = vperm.xlu0 %689, %v667
        %v691 = vpop.permute.xlu0 %690
        %692 = vset.pattern.permute.xlu0 0
        %693 = vperm.xlu0 %692, %v668
        %v694 = vpop.permute.xlu0 %693
        %695 = vset.pattern.permute.xlu0 0
        %696 = vperm.xlu0 %695, %v669
        %v697 = vpop.permute.xlu0 %696
        %698 = vset.pattern.permute.xlu0 0
        %699 = vperm.xlu0 %698, %v670
        %v700 = vpop.permute.xlu0 %699
        %701 = vset.pattern.permute.xlu0 0
        %702 = vperm.xlu0 %701, %v671
        %v703 = vpop.permute.xlu0 %702
        %704 = vset.pattern.permute.xlu0 0
        %705 = vperm.xlu0 %704, %v672
        %v706 = vpop.permute.xlu0 %705
        %707 = vset.pattern.permute.xlu0 0
        %708 = vperm.xlu0 %707, %v673
        %v709 = vpop.permute.xlu0 %708
        %710 = vset.pattern.permute.xlu0 0
        %711 = vperm.xlu0 %710, %v674
        %v712 = vpop.permute.xlu0 %711
        %713 = vset.pattern.permute.xlu0 0
        %714 = vperm.xlu0 %713, %v675
        %v715 = vpop.permute.xlu0 %714
        %716 = vset.pattern.permute.xlu0 0
        %717 = vperm.xlu0 %716, %v676
        %v718 = vpop.permute.xlu0 %717
        %719 = vset.pattern.permute.xlu0 0
        %720 = vperm.xlu0 %719, %v677
        %v721 = vpop.permute.xlu0 %720
        %722 = vset.pattern.permute.xlu0 0
        %723 = vperm.xlu0 %722, %v678
        %v724 = vpop.permute.xlu0 %723
        %725 = vset.pattern.permute.xlu0 0
        %726 = vperm.xlu0 %725, %v679
        %v727 = vpop.permute.xlu0 %726
        %vm728 = vcmp.eq.s32.totalorder %v682, 1
        %vm729 = vcmp.eq.s32.totalorder %v685, 1
        %vm730 = vcmp.eq.s32.totalorder %v688, 1
        %vm731 = vcmp.eq.s32.totalorder %v691, 1
        %vm732 = vcmp.eq.s32.totalorder %v694, 1
        %vm733 = vcmp.eq.s32.totalorder %v697, 1
        %vm734 = vcmp.eq.s32.totalorder %v700, 1
        %vm735 = vcmp.eq.s32.totalorder %v703, 1
        %vm736 = vcmp.eq.s32.totalorder %v706, 1
        %vm737 = vcmp.eq.s32.totalorder %v709, 1
        %vm738 = vcmp.eq.s32.totalorder %v712, 1
        %vm739 = vcmp.eq.s32.totalorder %v715, 1
        %vm740 = vcmp.eq.s32.totalorder %v718, 1
        %vm741 = vcmp.eq.s32.totalorder %v721, 1
        %vm742 = vcmp.eq.s32.totalorder %v724, 1
        %vm743 = vcmp.eq.s32.totalorder %v727, 1
        %v744 = vsel %vm663, 1, 0
        %v745 = vlaneseq
        %v746 = vshrl.u32 %v745, 7
        %v747 = vsub.s32 0, %v746
        %v748 = vrot.slane %v744, %v747
        %vm749 = vcmp.eq.s32.totalorder %v748, 1
        %vm750 = vmand %vm728, %vm749
        %vm751 = vmand %vm729, %vm749
        %vm752 = vmand %vm730, %vm749
        %vm753 = vmand %vm731, %vm749
        %vm754 = vmand %vm732, %vm749
        %vm755 = vmand %vm733, %vm749
        %vm756 = vmand %vm734, %vm749
        %vm757 = vmand %vm735, %vm749
        %vm758 = vmand %vm736, %vm749
        %vm759 = vmand %vm737, %vm749
        %vm760 = vmand %vm738, %vm749
        %vm761 = vmand %vm739, %vm749
        %vm762 = vmand %vm740, %vm749
        %vm763 = vmand %vm741, %vm749
        %vm764 = vmand %vm742, %vm749
        %vm765 = vmand %vm743, %vm749
        %v766 = vlaneseq
        %v767 = vshrl.u32 %v766, 7
        %v768 = vadd.s32 %v767, 8
        %v769 = vadd.s32 %v767, 16
        %v770 = vadd.s32 %v767, 24
        %v771 = vadd.s32 %v767, 32
        %v772 = vadd.s32 %v767, 40
        %v773 = vadd.s32 %v767, 48
        %v774 = vadd.s32 %v767, 56
        %v775 = vadd.s32 %v767, 64
        %v776 = vadd.s32 %v767, 72
        %v777 = vadd.s32 %v767, 80
        %v778 = vadd.s32 %v767, 88
        %v779 = vadd.s32 %v767, 96
        %v780 = vadd.s32 %v767, 104
        %v781 = vadd.s32 %v767, 112
        %v782 = vadd.s32 %v767, 120
        %s783 = ssub.s32 %s22, %s23
        %s784 = smul.u32 %s783, 128
        %v785 = vstv %s784
        %v786 = vadd.s32 %v767, %v785
        %v787 = vadd.s32 %v768, %v785
        %v788 = vadd.s32 %v769, %v785
        %v789 = vadd.s32 %v770, %v785
        %v790 = vadd.s32 %v771, %v785
        %v791 = vadd.s32 %v772, %v785
        %v792 = vadd.s32 %v773, %v785
        %v793 = vadd.s32 %v774, %v785
        %v794 = vadd.s32 %v775, %v785
        %v795 = vadd.s32 %v776, %v785
        %v796 = vadd.s32 %v777, %v785
        %v797 = vadd.s32 %v778, %v785
        %v798 = vadd.s32 %v779, %v785
        %v799 = vadd.s32 %v780, %v785
        %v800 = vadd.s32 %v781, %v785
        %v801 = vadd.s32 %v782, %v785
        %v802 = vlaneseq
        %v803 = vand.u32 %v802, 127
        %vm804 = vcmp.ne.s32.totalorder %v786, %v803
        %vm805 = vcmp.ne.s32.totalorder %v787, %v803
        %vm806 = vcmp.ne.s32.totalorder %v788, %v803
        %vm807 = vcmp.ne.s32.totalorder %v789, %v803
        %vm808 = vcmp.ne.s32.totalorder %v790, %v803
        %vm809 = vcmp.ne.s32.totalorder %v791, %v803
        %vm810 = vcmp.ne.s32.totalorder %v792, %v803
        %vm811 = vcmp.ne.s32.totalorder %v793, %v803
        %vm812 = vcmp.ne.s32.totalorder %v794, %v803
        %vm813 = vcmp.ne.s32.totalorder %v795, %v803
        %vm814 = vcmp.ne.s32.totalorder %v796, %v803
        %vm815 = vcmp.ne.s32.totalorder %v797, %v803
        %vm816 = vcmp.ne.s32.totalorder %v798, %v803
        %vm817 = vcmp.ne.s32.totalorder %v799, %v803
        %vm818 = vcmp.ne.s32.totalorder %v800, %v803
        %vm819 = vcmp.ne.s32.totalorder %v801, %v803
        %vm820 = vmand %vm631, %vm804
        %vm821 = vmand %vm632, %vm805
        %vm822 = vmand %vm633, %vm806
        %vm823 = vmand %vm634, %vm807
        %vm824 = vmand %vm635, %vm808
        %vm825 = vmand %vm636, %vm809
        %vm826 = vmand %vm637, %vm810
        %vm827 = vmand %vm638, %vm811
        %vm828 = vmand %vm639, %vm812
        %vm829 = vmand %vm640, %vm813
        %vm830 = vmand %vm641, %vm814
        %vm831 = vmand %vm642, %vm815
        %vm832 = vmand %vm643, %vm816
        %vm833 = vmand %vm644, %vm817
        %vm834 = vmand %vm645, %vm818
        %vm835 = vmand %vm646, %vm819
        %vm836 = vmxor %vm631, 1
        %vm837 = vmxor %vm632, 1
        %vm838 = vmxor %vm633, 1
        %vm839 = vmxor %vm634, 1
        %vm840 = vmxor %vm635, 1
        %vm841 = vmxor %vm636, 1
        %vm842 = vmxor %vm637, 1
        %vm843 = vmxor %vm638, 1
        %vm844 = vmxor %vm639, 1
        %vm845 = vmxor %vm640, 1
        %vm846 = vmxor %vm641, 1
        %vm847 = vmxor %vm642, 1
        %vm848 = vmxor %vm643, 1
        %vm849 = vmxor %vm644, 1
        %vm850 = vmxor %vm645, 1
        %vm851 = vmxor %vm646, 1
        %vm852 = vmand %vm836, %vm750
        %vm853 = vmand %vm837, %vm751
        %vm854 = vmand %vm838, %vm752
        %vm855 = vmand %vm839, %vm753
        %vm856 = vmand %vm840, %vm754
        %vm857 = vmand %vm841, %vm755
        %vm858 = vmand %vm842, %vm756
        %vm859 = vmand %vm843, %vm757
        %vm860 = vmand %vm844, %vm758
        %vm861 = vmand %vm845, %vm759
        %vm862 = vmand %vm846, %vm760
        %vm863 = vmand %vm847, %vm761
        %vm864 = vmand %vm848, %vm762
        %vm865 = vmand %vm849, %vm763
        %vm866 = vmand %vm850, %vm764
        %vm867 = vmand %vm851, %vm765
        %v868 = vld [vmem:[#allocation2] sm:$0xff]
        %v869 = vld [vmem:[#allocation2 + $0x8] sm:$0xff]
        %v870 = vld [vmem:[#allocation2 + $0x10] sm:$0xff]
        %v871 = vld [vmem:[#allocation2 + $0x18] sm:$0xff]
        %v872 = vld [vmem:[#allocation2 + $0x20] sm:$0xff]
        %v873 = vld [vmem:[#allocation2 + $0x28] sm:$0xff]
        %v874 = vld [vmem:[#allocation2 + $0x30] sm:$0xff]
        %v875 = vld [vmem:[#allocation2 + $0x38] sm:$0xff]
        %v876 = vld [vmem:[#allocation2 + $0x40] sm:$0xff]
        %v877 = vld [vmem:[#allocation2 + $0x48] sm:$0xff]
        %v878 = vld [vmem:[#allocation2 + $0x50] sm:$0xff]
        %v879 = vld [vmem:[#allocation2 + $0x58] sm:$0xff]
        %v880 = vld [vmem:[#allocation2 + $0x60] sm:$0xff]
        %v881 = vld [vmem:[#allocation2 + $0x68] sm:$0xff]
        %v882 = vld [vmem:[#allocation2 + $0x70] sm:$0xff]
        %v883 = vld [vmem:[#allocation2 + $0x78] sm:$0xff]
        %v884 = vsub.f32 %v500, 0.5
        %v885 = vsub.f32 %v503, 0.5
        %v886 = vsub.f32 %v508, 0.5
        %v887 = vsub.f32 %v511, 0.5
        %v888 = vsub.f32 %v516, 0.5
        %v889 = vsub.f32 %v519, 0.5
        %v890 = vsub.f32 %v524, 0.5
        %v891 = vsub.f32 %v527, 0.5
        %v892 = vsub.f32 %v532, 0.5
        %v893 = vsub.f32 %v535, 0.5
        %v894 = vsub.f32 %v540, 0.5
        %v895 = vsub.f32 %v543, 0.5
        %v896 = vsub.f32 %v548, 0.5
        %v897 = vsub.f32 %v551, 0.5
        %v898 = vsub.f32 %v556, 0.5
        %v899 = vsub.f32 %v559, 0.5
        %v900 = vmul.f32 %v884, -2.0
        %v901 = vmul.f32 %v885, -2.0
        %v902 = vmul.f32 %v886, -2.0
        %v903 = vmul.f32 %v887, -2.0
        %v904 = vmul.f32 %v888, -2.0
        %v905 = vmul.f32 %v889, -2.0
        %v906 = vmul.f32 %v890, -2.0
        %v907 = vmul.f32 %v891, -2.0
        %v908 = vmul.f32 %v892, -2.0
        %v909 = vmul.f32 %v893, -2.0
        %v910 = vmul.f32 %v894, -2.0
        %v911 = vmul.f32 %v895, -2.0
        %v912 = vmul.f32 %v896, -2.0
        %v913 = vmul.f32 %v897, -2.0
        %v914 = vmul.f32 %v898, -2.0
        %v915 = vmul.f32 %v899, -2.0
        %v916 = vmul.f32 %v900, 1.442695
        %v917 = vpow.pop %v916
        %v918 = vmul.f32 %v901, 1.442695
        %v919 = vpow.pop %v918
        %v920 = vmul.f32 %v902, 1.442695
        %v921 = vpow.pop %v920
        %v922 = vmul.f32 %v903, 1.442695
        %v923 = vpow.pop %v922
        %v924 = vmul.f32 %v904, 1.442695
        %v925 = vpow.pop %v924
        %v926 = vmul.f32 %v905, 1.442695
        %v927 = vpow.pop %v926
        %v928 = vmul.f32 %v906, 1.442695
        %v929 = vpow.pop %v928
        %v930 = vmul.f32 %v907, 1.442695
        %v931 = vpow.pop %v930
        %v932 = vmul.f32 %v908, 1.442695
        %v933 = vpow.pop %v932
        %v934 = vmul.f32 %v909, 1.442695
        %v935 = vpow.pop %v934
        %v936 = vmul.f32 %v910, 1.442695
        %v937 = vpow.pop %v936
        %v938 = vmul.f32 %v911, 1.442695
        %v939 = vpow.pop %v938
        %v940 = vmul.f32 %v912, 1.442695
        %v941 = vpow.pop %v940
        %v942 = vmul.f32 %v913, 1.442695
        %v943 = vpow.pop %v942
        %v944 = vmul.f32 %v914, 1.442695
        %v945 = vpow.pop %v944
        %v946 = vmul.f32 %v915, 1.442695
        %v947 = vpow.pop %v946
        %v948 = vsel %vm820, %v917, 0.0
        %v949 = vsel %vm821, %v919, 0.0
        %v950 = vsel %vm822, %v921, 0.0
        %v951 = vsel %vm823, %v923, 0.0
        %v952 = vsel %vm824, %v925, 0.0
        %v953 = vsel %vm825, %v927, 0.0
        %v954 = vsel %vm826, %v929, 0.0
        %v955 = vsel %vm827, %v931, 0.0
        %v956 = vsel %vm828, %v933, 0.0
        %v957 = vsel %vm829, %v935, 0.0
        %v958 = vsel %vm830, %v937, 0.0
        %v959 = vsel %vm831, %v939, 0.0
        %v960 = vsel %vm832, %v941, 0.0
        %v961 = vsel %vm833, %v943, 0.0
        %v962 = vsel %vm834, %v945, 0.0
        %v963 = vsel %vm835, %v947, 0.0
        %v964 = vadd.f32 %v868, %v948
        %v965 = vadd.f32 %v869, %v949
        %v966 = vadd.f32 %v870, %v950
        %v967 = vadd.f32 %v871, %v951
        %v968 = vadd.f32 %v872, %v952
        %v969 = vadd.f32 %v873, %v953
        %v970 = vadd.f32 %v874, %v954
        %v971 = vadd.f32 %v875, %v955
        %v972 = vadd.f32 %v876, %v956
        %v973 = vadd.f32 %v877, %v957
        %v974 = vadd.f32 %v878, %v958
        %v975 = vadd.f32 %v879, %v959
        %v976 = vadd.f32 %v880, %v960
        %v977 = vadd.f32 %v881, %v961
        %v978 = vadd.f32 %v882, %v962
        %v979 = vadd.f32 %v883, %v963
        %980 = vst [vmem:[#allocation2] sm:$0xff] %v964
        %981 = vst [vmem:[#allocation2 + $0x8] sm:$0xff] %v965
        %982 = vst [vmem:[#allocation2 + $0x10] sm:$0xff] %v966
        %983 = vst [vmem:[#allocation2 + $0x18] sm:$0xff] %v967
        %984 = vst [vmem:[#allocation2 + $0x20] sm:$0xff] %v968
        %985 = vst [vmem:[#allocation2 + $0x28] sm:$0xff] %v969
        %986 = vst [vmem:[#allocation2 + $0x30] sm:$0xff] %v970
        %987 = vst [vmem:[#allocation2 + $0x38] sm:$0xff] %v971
        %988 = vst [vmem:[#allocation2 + $0x40] sm:$0xff] %v972
        %989 = vst [vmem:[#allocation2 + $0x48] sm:$0xff] %v973
        %990 = vst [vmem:[#allocation2 + $0x50] sm:$0xff] %v974
        %991 = vst [vmem:[#allocation2 + $0x58] sm:$0xff] %v975
        %992 = vst [vmem:[#allocation2 + $0x60] sm:$0xff] %v976
        %993 = vst [vmem:[#allocation2 + $0x68] sm:$0xff] %v977
        %994 = vst [vmem:[#allocation2 + $0x70] sm:$0xff] %v978
        %995 = vst [vmem:[#allocation2 + $0x78] sm:$0xff] %v979
        %v996 = vld [vmem:[#allocation3] sm:$0xff]
        %v997 = vld [vmem:[#allocation3 + $0x8] sm:$0xff]
        %v998 = vld [vmem:[#allocation3 + $0x10] sm:$0xff]
        %v999 = vld [vmem:[#allocation3 + $0x18] sm:$0xff]
        %v1000 = vld [vmem:[#allocation3 + $0x20] sm:$0xff]
        %v1001 = vld [vmem:[#allocation3 + $0x28] sm:$0xff]
        %v1002 = vld [vmem:[#allocation3 + $0x30] sm:$0xff]
        %v1003 = vld [vmem:[#allocation3 + $0x38] sm:$0xff]
        %v1004 = vld [vmem:[#allocation3 + $0x40] sm:$0xff]
        %v1005 = vld [vmem:[#allocation3 + $0x48] sm:$0xff]
        %v1006 = vld [vmem:[#allocation3 + $0x50] sm:$0xff]
        %v1007 = vld [vmem:[#allocation3 + $0x58] sm:$0xff]
        %v1008 = vld [vmem:[#allocation3 + $0x60] sm:$0xff]
        %v1009 = vld [vmem:[#allocation3 + $0x68] sm:$0xff]
        %v1010 = vld [vmem:[#allocation3 + $0x70] sm:$0xff]
        %v1011 = vld [vmem:[#allocation3 + $0x78] sm:$0xff]
        %v1012 = vmul.f32 %v884, 50.0
        %v1013 = vmul.f32 %v885, 50.0
        %v1014 = vmul.f32 %v886, 50.0
        %v1015 = vmul.f32 %v887, 50.0
        %v1016 = vmul.f32 %v888, 50.0
        %v1017 = vmul.f32 %v889, 50.0
        %v1018 = vmul.f32 %v890, 50.0
        %v1019 = vmul.f32 %v891, 50.0
        %v1020 = vmul.f32 %v892, 50.0
        %v1021 = vmul.f32 %v893, 50.0
        %v1022 = vmul.f32 %v894, 50.0
        %v1023 = vmul.f32 %v895, 50.0
        %v1024 = vmul.f32 %v896, 50.0
        %v1025 = vmul.f32 %v897, 50.0
        %v1026 = vmul.f32 %v898, 50.0
        %v1027 = vmul.f32 %v899, 50.0
        %v1028 = vmul.f32 %v1012, 1.442695
        %v1029 = vpow.pop %v1028
        %v1030 = vmul.f32 %v1013, 1.442695
        %v1031 = vpow.pop %v1030
        %v1032 = vmul.f32 %v1014, 1.442695
        %v1033 = vpow.pop %v1032
        %v1034 = vmul.f32 %v1015, 1.442695
        %v1035 = vpow.pop %v1034
        %v1036 = vmul.f32 %v1016, 1.442695
        %v1037 = vpow.pop %v1036
        %v1038 = vmul.f32 %v1017, 1.442695
        %v1039 = vpow.pop %v1038
        %v1040 = vmul.f32 %v1018, 1.442695
        %v1041 = vpow.pop %v1040
        %v1042 = vmul.f32 %v1019, 1.442695
        %v1043 = vpow.pop %v1042
        %v1044 = vmul.f32 %v1020, 1.442695
        %v1045 = vpow.pop %v1044
        %v1046 = vmul.f32 %v1021, 1.442695
        %v1047 = vpow.pop %v1046
        %v1048 = vmul.f32 %v1022, 1.442695
        %v1049 = vpow.pop %v1048
        %v1050 = vmul.f32 %v1023, 1.442695
        %v1051 = vpow.pop %v1050
        %v1052 = vmul.f32 %v1024, 1.442695
        %v1053 = vpow.pop %v1052
        %v1054 = vmul.f32 %v1025, 1.442695
        %v1055 = vpow.pop %v1054
        %v1056 = vmul.f32 %v1026, 1.442695
        %v1057 = vpow.pop %v1056
        %v1058 = vmul.f32 %v1027, 1.442695
        %v1059 = vpow.pop %v1058
        %v1060 = vsel %vm852, %v1029, 0.0
        %v1061 = vsel %vm853, %v1031, 0.0
        %v1062 = vsel %vm854, %v1033, 0.0
        %v1063 = vsel %vm855, %v1035, 0.0
        %v1064 = vsel %vm856, %v1037, 0.0
        %v1065 = vsel %vm857, %v1039, 0.0
        %v1066 = vsel %vm858, %v1041, 0.0
        %v1067 = vsel %vm859, %v1043, 0.0
        %v1068 = vsel %vm860, %v1045, 0.0
        %v1069 = vsel %vm861, %v1047, 0.0
        %v1070 = vsel %vm862, %v1049, 0.0
        %v1071 = vsel %vm863, %v1051, 0.0
        %v1072 = vsel %vm864, %v1053, 0.0
        %v1073 = vsel %vm865, %v1055, 0.0
        %v1074 = vsel %vm866, %v1057, 0.0
        %v1075 = vsel %vm867, %v1059, 0.0
        %v1076 = vadd.f32 %v996, %v1060
        %v1077 = vadd.f32 %v997, %v1061
        %v1078 = vadd.f32 %v998, %v1062
        %v1079 = vadd.f32 %v999, %v1063
        %v1080 = vadd.f32 %v1000, %v1064
        %v1081 = vadd.f32 %v1001, %v1065
        %v1082 = vadd.f32 %v1002, %v1066
        %v1083 = vadd.f32 %v1003, %v1067
        %v1084 = vadd.f32 %v1004, %v1068
        %v1085 = vadd.f32 %v1005, %v1069
        %v1086 = vadd.f32 %v1006, %v1070
        %v1087 = vadd.f32 %v1007, %v1071
        %v1088 = vadd.f32 %v1008, %v1072
        %v1089 = vadd.f32 %v1009, %v1073
        %v1090 = vadd.f32 %v1010, %v1074
        %v1091 = vadd.f32 %v1011, %v1075
        %1092 = vst [vmem:[#allocation3] sm:$0xff] %v1076
        %1093 = vst [vmem:[#allocation3 + $0x8] sm:$0xff] %v1077
        %1094 = vst [vmem:[#allocation3 + $0x10] sm:$0xff] %v1078
        %1095 = vst [vmem:[#allocation3 + $0x18] sm:$0xff] %v1079
        %1096 = vst [vmem:[#allocation3 + $0x20] sm:$0xff] %v1080
        %1097 = vst [vmem:[#allocation3 + $0x28] sm:$0xff] %v1081
        %1098 = vst [vmem:[#allocation3 + $0x30] sm:$0xff] %v1082
        %1099 = vst [vmem:[#allocation3 + $0x38] sm:$0xff] %v1083
        %1100 = vst [vmem:[#allocation3 + $0x40] sm:$0xff] %v1084
        %1101 = vst [vmem:[#allocation3 + $0x48] sm:$0xff] %v1085
        %1102 = vst [vmem:[#allocation3 + $0x50] sm:$0xff] %v1086
        %1103 = vst [vmem:[#allocation3 + $0x58] sm:$0xff] %v1087
        %1104 = vst [vmem:[#allocation3 + $0x60] sm:$0xff] %v1088
        %1105 = vst [vmem:[#allocation3 + $0x68] sm:$0xff] %v1089
        %1106 = vst [vmem:[#allocation3 + $0x70] sm:$0xff] %v1090
        %1107 = vst [vmem:[#allocation3 + $0x78] sm:$0xff] %v1091
        %v1108 = vld [vmem:[#allocation4] sm:$0xff]
        %v1109 = vld [vmem:[#allocation4 + $0x8] sm:$0xff]
        %v1110 = vld [vmem:[#allocation4 + $0x10] sm:$0xff]
        %v1111 = vld [vmem:[#allocation4 + $0x18] sm:$0xff]
        %v1112 = vld [vmem:[#allocation4 + $0x20] sm:$0xff]
        %v1113 = vld [vmem:[#allocation4 + $0x28] sm:$0xff]
        %v1114 = vld [vmem:[#allocation4 + $0x30] sm:$0xff]
        %v1115 = vld [vmem:[#allocation4 + $0x38] sm:$0xff]
        %v1116 = vld [vmem:[#allocation4 + $0x40] sm:$0xff]
        %v1117 = vld [vmem:[#allocation4 + $0x48] sm:$0xff]
        %v1118 = vld [vmem:[#allocation4 + $0x50] sm:$0xff]
        %v1119 = vld [vmem:[#allocation4 + $0x58] sm:$0xff]
        %v1120 = vld [vmem:[#allocation4 + $0x60] sm:$0xff]
        %v1121 = vld [vmem:[#allocation4 + $0x68] sm:$0xff]
        %v1122 = vld [vmem:[#allocation4 + $0x70] sm:$0xff]
        %v1123 = vld [vmem:[#allocation4 + $0x78] sm:$0xff]
        %v1124 = vsub.f32 1.0, %v500
        %v1125 = vsub.f32 1.0, %v503
        %v1126 = vsub.f32 1.0, %v508
        %v1127 = vsub.f32 1.0, %v511
        %v1128 = vsub.f32 1.0, %v516
        %v1129 = vsub.f32 1.0, %v519
        %v1130 = vsub.f32 1.0, %v524
        %v1131 = vsub.f32 1.0, %v527
        %v1132 = vsub.f32 1.0, %v532
        %v1133 = vsub.f32 1.0, %v535
        %v1134 = vsub.f32 1.0, %v540
        %v1135 = vsub.f32 1.0, %v543
        %v1136 = vsub.f32 1.0, %v548
        %v1137 = vsub.f32 1.0, %v551
        %v1138 = vsub.f32 1.0, %v556
        %v1139 = vsub.f32 1.0, %v559
        %v1140 = vmax.f32 %v1124, 0.0
        %v1141 = vmax.f32 %v1125, 0.0
        %v1142 = vmax.f32 %v1126, 0.0
        %v1143 = vmax.f32 %v1127, 0.0
        %v1144 = vmax.f32 %v1128, 0.0
        %v1145 = vmax.f32 %v1129, 0.0
        %v1146 = vmax.f32 %v1130, 0.0
        %v1147 = vmax.f32 %v1131, 0.0
        %v1148 = vmax.f32 %v1132, 0.0
        %v1149 = vmax.f32 %v1133, 0.0
        %v1150 = vmax.f32 %v1134, 0.0
        %v1151 = vmax.f32 %v1135, 0.0
        %v1152 = vmax.f32 %v1136, 0.0
        %v1153 = vmax.f32 %v1137, 0.0
        %v1154 = vmax.f32 %v1138, 0.0
        %v1155 = vmax.f32 %v1139, 0.0
        %v1156 = vsel %vm820, %v1140, 0.0
        %v1157 = vsel %vm821, %v1141, 0.0
        %v1158 = vsel %vm822, %v1142, 0.0
        %v1159 = vsel %vm823, %v1143, 0.0
        %v1160 = vsel %vm824, %v1144, 0.0
        %v1161 = vsel %vm825, %v1145, 0.0
        %v1162 = vsel %vm826, %v1146, 0.0
        %v1163 = vsel %vm827, %v1147, 0.0
        %v1164 = vsel %vm828, %v1148, 0.0
        %v1165 = vsel %vm829, %v1149, 0.0
        %v1166 = vsel %vm830, %v1150, 0.0
        %v1167 = vsel %vm831, %v1151, 0.0
        %v1168 = vsel %vm832, %v1152, 0.0
        %v1169 = vsel %vm833, %v1153, 0.0
        %v1170 = vsel %vm834, %v1154, 0.0
        %v1171 = vsel %vm835, %v1155, 0.0
        %v1172 = vadd.f32 %v1108, %v1156
        %v1173 = vadd.f32 %v1109, %v1157
        %v1174 = vadd.f32 %v1110, %v1158
        %v1175 = vadd.f32 %v1111, %v1159
        %v1176 = vadd.f32 %v1112, %v1160
        %v1177 = vadd.f32 %v1113, %v1161
        %v1178 = vadd.f32 %v1114, %v1162
        %v1179 = vadd.f32 %v1115, %v1163
        %v1180 = vadd.f32 %v1116, %v1164
        %v1181 = vadd.f32 %v1117, %v1165
        %v1182 = vadd.f32 %v1118, %v1166
        %v1183 = vadd.f32 %v1119, %v1167
        %v1184 = vadd.f32 %v1120, %v1168
        %v1185 = vadd.f32 %v1121, %v1169
        %v1186 = vadd.f32 %v1122, %v1170
        %v1187 = vadd.f32 %v1123, %v1171
        %1188 = vst [vmem:[#allocation4] sm:$0xff] %v1172
        %1189 = vst [vmem:[#allocation4 + $0x8] sm:$0xff] %v1173
        %1190 = vst [vmem:[#allocation4 + $0x10] sm:$0xff] %v1174
        %1191 = vst [vmem:[#allocation4 + $0x18] sm:$0xff] %v1175
        %1192 = vst [vmem:[#allocation4 + $0x20] sm:$0xff] %v1176
        %1193 = vst [vmem:[#allocation4 + $0x28] sm:$0xff] %v1177
        %1194 = vst [vmem:[#allocation4 + $0x30] sm:$0xff] %v1178
        %1195 = vst [vmem:[#allocation4 + $0x38] sm:$0xff] %v1179
        %1196 = vst [vmem:[#allocation4 + $0x40] sm:$0xff] %v1180
        %1197 = vst [vmem:[#allocation4 + $0x48] sm:$0xff] %v1181
        %1198 = vst [vmem:[#allocation4 + $0x50] sm:$0xff] %v1182
        %1199 = vst [vmem:[#allocation4 + $0x58] sm:$0xff] %v1183
        %1200 = vst [vmem:[#allocation4 + $0x60] sm:$0xff] %v1184
        %1201 = vst [vmem:[#allocation4 + $0x68] sm:$0xff] %v1185
        %1202 = vst [vmem:[#allocation4 + $0x70] sm:$0xff] %v1186
        %1203 = vst [vmem:[#allocation4 + $0x78] sm:$0xff] %v1187
        %v1204 = vld [vmem:[#allocation5] sm:$0xff]
        %v1205 = vld [vmem:[#allocation5 + $0x8] sm:$0xff]
        %v1206 = vld [vmem:[#allocation5 + $0x10] sm:$0xff]
        %v1207 = vld [vmem:[#allocation5 + $0x18] sm:$0xff]
        %v1208 = vld [vmem:[#allocation5 + $0x20] sm:$0xff]
        %v1209 = vld [vmem:[#allocation5 + $0x28] sm:$0xff]
        %v1210 = vld [vmem:[#allocation5 + $0x30] sm:$0xff]
        %v1211 = vld [vmem:[#allocation5 + $0x38] sm:$0xff]
        %v1212 = vld [vmem:[#allocation5 + $0x40] sm:$0xff]
        %v1213 = vld [vmem:[#allocation5 + $0x48] sm:$0xff]
        %v1214 = vld [vmem:[#allocation5 + $0x50] sm:$0xff]
        %v1215 = vld [vmem:[#allocation5 + $0x58] sm:$0xff]
        %v1216 = vld [vmem:[#allocation5 + $0x60] sm:$0xff]
        %v1217 = vld [vmem:[#allocation5 + $0x68] sm:$0xff]
        %v1218 = vld [vmem:[#allocation5 + $0x70] sm:$0xff]
        %v1219 = vld [vmem:[#allocation5 + $0x78] sm:$0xff]
        %v1220 = vmax.f32 %v500, 0.0
        %v1221 = vmax.f32 %v503, 0.0
        %v1222 = vmax.f32 %v508, 0.0
        %v1223 = vmax.f32 %v511, 0.0
        %v1224 = vmax.f32 %v516, 0.0
        %v1225 = vmax.f32 %v519, 0.0
        %v1226 = vmax.f32 %v524, 0.0
        %v1227 = vmax.f32 %v527, 0.0
        %v1228 = vmax.f32 %v532, 0.0
        %v1229 = vmax.f32 %v535, 0.0
        %v1230 = vmax.f32 %v540, 0.0
        %v1231 = vmax.f32 %v543, 0.0
        %v1232 = vmax.f32 %v548, 0.0
        %v1233 = vmax.f32 %v551, 0.0
        %v1234 = vmax.f32 %v556, 0.0
        %v1235 = vmax.f32 %v559, 0.0
        %v1236 = vsel %vm852, %v1220, 0.0
        %v1237 = vsel %vm853, %v1221, 0.0
        %v1238 = vsel %vm854, %v1222, 0.0
        %v1239 = vsel %vm855, %v1223, 0.0
        %v1240 = vsel %vm856, %v1224, 0.0
        %v1241 = vsel %vm857, %v1225, 0.0
        %v1242 = vsel %vm858, %v1226, 0.0
        %v1243 = vsel %vm859, %v1227, 0.0
        %v1244 = vsel %vm860, %v1228, 0.0
        %v1245 = vsel %vm861, %v1229, 0.0
        %v1246 = vsel %vm862, %v1230, 0.0
        %v1247 = vsel %vm863, %v1231, 0.0
        %v1248 = vsel %vm864, %v1232, 0.0
        %v1249 = vsel %vm865, %v1233, 0.0
        %v1250 = vsel %vm866, %v1234, 0.0
        %v1251 = vsel %vm867, %v1235, 0.0
        %v1252 = vadd.f32 %v1204, %v1236
        %v1253 = vadd.f32 %v1205, %v1237
        %v1254 = vadd.f32 %v1206, %v1238
        %v1255 = vadd.f32 %v1207, %v1239
        %v1256 = vadd.f32 %v1208, %v1240
        %v1257 = vadd.f32 %v1209, %v1241
        %v1258 = vadd.f32 %v1210, %v1242
        %v1259 = vadd.f32 %v1211, %v1243
        %v1260 = vadd.f32 %v1212, %v1244
        %v1261 = vadd.f32 %v1213, %v1245
        %v1262 = vadd.f32 %v1214, %v1246
        %v1263 = vadd.f32 %v1215, %v1247
        %v1264 = vadd.f32 %v1216, %v1248
        %v1265 = vadd.f32 %v1217, %v1249
        %v1266 = vadd.f32 %v1218, %v1250
        %v1267 = vadd.f32 %v1219, %v1251
        %1268 = vst [vmem:[#allocation5] sm:$0xff] %v1252
        %1269 = vst [vmem:[#allocation5 + $0x8] sm:$0xff] %v1253
        %1270 = vst [vmem:[#allocation5 + $0x10] sm:$0xff] %v1254
        %1271 = vst [vmem:[#allocation5 + $0x18] sm:$0xff] %v1255
        %1272 = vst [vmem:[#allocation5 + $0x20] sm:$0xff] %v1256
        %1273 = vst [vmem:[#allocation5 + $0x28] sm:$0xff] %v1257
        %1274 = vst [vmem:[#allocation5 + $0x30] sm:$0xff] %v1258
        %1275 = vst [vmem:[#allocation5 + $0x38] sm:$0xff] %v1259
        %1276 = vst [vmem:[#allocation5 + $0x40] sm:$0xff] %v1260
        %1277 = vst [vmem:[#allocation5 + $0x48] sm:$0xff] %v1261
        %1278 = vst [vmem:[#allocation5 + $0x50] sm:$0xff] %v1262
        %1279 = vst [vmem:[#allocation5 + $0x58] sm:$0xff] %v1263
        %1280 = vst [vmem:[#allocation5 + $0x60] sm:$0xff] %v1264
        %1281 = vst [vmem:[#allocation5 + $0x68] sm:$0xff] %v1265
        %1282 = vst [vmem:[#allocation5 + $0x70] sm:$0xff] %v1266
        %1283 = vst [vmem:[#allocation5 + $0x78] sm:$0xff] %v1267
        %p1284 = scmp.eq.s32.totalorder %s23, 1
        // Predicated region
        $region41: #{tpu_custom_call.1} parent=35 // pred_check
          %p1285 = pneg %p1284
        $region42: #{tpu_custom_call.1} parent=35 // pred_check_branch
          %1287 = sbr.rel (%p1285) target = $region44
        $region43: #{tpu_custom_call.1} parent=35 // pred_region
          %v1288 = vld [vmem:[#allocation2] sm:$0xff]
          %v1289 = vld [vmem:[#allocation2 + $0x8] sm:$0xff]
          %v1290 = vld [vmem:[#allocation2 + $0x10] sm:$0xff]
          %v1291 = vld [vmem:[#allocation2 + $0x18] sm:$0xff]
          %v1292 = vld [vmem:[#allocation2 + $0x20] sm:$0xff]
          %v1293 = vld [vmem:[#allocation2 + $0x28] sm:$0xff]
          %v1294 = vld [vmem:[#allocation2 + $0x30] sm:$0xff]
          %v1295 = vld [vmem:[#allocation2 + $0x38] sm:$0xff]
          %v1296 = vld [vmem:[#allocation2 + $0x40] sm:$0xff]
          %v1297 = vld [vmem:[#allocation2 + $0x48] sm:$0xff]
          %v1298 = vld [vmem:[#allocation2 + $0x50] sm:$0xff]
          %v1299 = vld [vmem:[#allocation2 + $0x58] sm:$0xff]
          %v1300 = vld [vmem:[#allocation2 + $0x60] sm:$0xff]
          %v1301 = vld [vmem:[#allocation2 + $0x68] sm:$0xff]
          %v1302 = vld [vmem:[#allocation2 + $0x70] sm:$0xff]
          %v1303 = vld [vmem:[#allocation2 + $0x78] sm:$0xff]
          %1304 = vadd.xlane.f32.xlu0 %v1288
          %v1305 = vpop.xlane.xlu0 %1304
          %1306 = vadd.xlane.f32.xlu0 %v1289
          %v1307 = vpop.xlane.xlu0 %1306
          %1308 = vadd.xlane.f32.xlu0 %v1290
          %v1309 = vpop.xlane.xlu0 %1308
          %1310 = vadd.xlane.f32.xlu0 %v1291
          %v1311 = vpop.xlane.xlu0 %1310
          %1312 = vadd.xlane.f32.xlu0 %v1292
          %v1313 = vpop.xlane.xlu0 %1312
          %1314 = vadd.xlane.f32.xlu0 %v1293
          %v1315 = vpop.xlane.xlu0 %1314
          %1316 = vadd.xlane.f32.xlu0 %v1294
          %v1317 = vpop.xlane.xlu0 %1316
          %1318 = vadd.xlane.f32.xlu0 %v1295
          %v1319 = vpop.xlane.xlu0 %1318
          %1320 = vadd.xlane.f32.xlu0 %v1296
          %v1321 = vpop.xlane.xlu0 %1320
          %1322 = vadd.xlane.f32.xlu0 %v1297
          %v1323 = vpop.xlane.xlu0 %1322
          %1324 = vadd.xlane.f32.xlu0 %v1298
          %v1325 = vpop.xlane.xlu0 %1324
          %1326 = vadd.xlane.f32.xlu0 %v1299
          %v1327 = vpop.xlane.xlu0 %1326
          %1328 = vadd.xlane.f32.xlu0 %v1300
          %v1329 = vpop.xlane.xlu0 %1328
          %1330 = vadd.xlane.f32.xlu0 %v1301
          %v1331 = vpop.xlane.xlu0 %1330
          %1332 = vadd.xlane.f32.xlu0 %v1302
          %v1333 = vpop.xlane.xlu0 %1332
          %1334 = vadd.xlane.f32.xlu0 %v1303
          %v1335 = vpop.xlane.xlu0 %1334
          %v1336 = vld [vmem:[#allocation3] sm:$0xff]
          %v1337 = vld [vmem:[#allocation3 + $0x8] sm:$0xff]
          %v1338 = vld [vmem:[#allocation3 + $0x10] sm:$0xff]
          %v1339 = vld [vmem:[#allocation3 + $0x18] sm:$0xff]
          %v1340 = vld [vmem:[#allocation3 + $0x20] sm:$0xff]
          %v1341 = vld [vmem:[#allocation3 + $0x28] sm:$0xff]
          %v1342 = vld [vmem:[#allocation3 + $0x30] sm:$0xff]
          %v1343 = vld [vmem:[#allocation3 + $0x38] sm:$0xff]
          %v1344 = vld [vmem:[#allocation3 + $0x40] sm:$0xff]
          %v1345 = vld [vmem:[#allocation3 + $0x48] sm:$0xff]
          %v1346 = vld [vmem:[#allocation3 + $0x50] sm:$0xff]
          %v1347 = vld [vmem:[#allocation3 + $0x58] sm:$0xff]
          %v1348 = vld [vmem:[#allocation3 + $0x60] sm:$0xff]
          %v1349 = vld [vmem:[#allocation3 + $0x68] sm:$0xff]
          %v1350 = vld [vmem:[#allocation3 + $0x70] sm:$0xff]
          %v1351 = vld [vmem:[#allocation3 + $0x78] sm:$0xff]
          %1352 = vadd.xlane.f32.xlu0 %v1336
          %v1353 = vpop.xlane.xlu0 %1352
          %1354 = vadd.xlane.f32.xlu0 %v1337
          %v1355 = vpop.xlane.xlu0 %1354
          %1356 = vadd.xlane.f32.xlu0 %v1338
          %v1357 = vpop.xlane.xlu0 %1356
          %1358 = vadd.xlane.f32.xlu0 %v1339
          %v1359 = vpop.xlane.xlu0 %1358
          %1360 = vadd.xlane.f32.xlu0 %v1340
          %v1361 = vpop.xlane.xlu0 %1360
          %1362 = vadd.xlane.f32.xlu0 %v1341
          %v1363 = vpop.xlane.xlu0 %1362
          %1364 = vadd.xlane.f32.xlu0 %v1342
          %v1365 = vpop.xlane.xlu0 %1364
          %1366 = vadd.xlane.f32.xlu0 %v1343
          %v1367 = vpop.xlane.xlu0 %1366
          %1368 = vadd.xlane.f32.xlu0 %v1344
          %v1369 = vpop.xlane.xlu0 %1368
          %1370 = vadd.xlane.f32.xlu0 %v1345
          %v1371 = vpop.xlane.xlu0 %1370
          %1372 = vadd.xlane.f32.xlu0 %v1346
          %v1373 = vpop.xlane.xlu0 %1372
          %1374 = vadd.xlane.f32.xlu0 %v1347
          %v1375 = vpop.xlane.xlu0 %1374
          %1376 = vadd.xlane.f32.xlu0 %v1348
          %v1377 = vpop.xlane.xlu0 %1376
          %1378 = vadd.xlane.f32.xlu0 %v1349
          %v1379 = vpop.xlane.xlu0 %1378
          %1380 = vadd.xlane.f32.xlu0 %v1350
          %v1381 = vpop.xlane.xlu0 %1380
          %1382 = vadd.xlane.f32.xlu0 %v1351
          %v1383 = vpop.xlane.xlu0 %1382
          %v1384 = vadd.f32 %v1305, 1.0
          %v1385 = vadd.f32 %v1307, 1.0
          %v1386 = vadd.f32 %v1309, 1.0
          %v1387 = vadd.f32 %v1311, 1.0
          %v1388 = vadd.f32 %v1313, 1.0
          %v1389 = vadd.f32 %v1315, 1.0
          %v1390 = vadd.f32 %v1317, 1.0
          %v1391 = vadd.f32 %v1319, 1.0
          %v1392 = vadd.f32 %v1321, 1.0
          %v1393 = vadd.f32 %v1323, 1.0
          %v1394 = vadd.f32 %v1325, 1.0
          %v1395 = vadd.f32 %v1327, 1.0
          %v1396 = vadd.f32 %v1329, 1.0
          %v1397 = vadd.f32 %v1331, 1.0
          %v1398 = vadd.f32 %v1333, 1.0
          %v1399 = vadd.f32 %v1335, 1.0
          %v1400 = vlog2.pop %v1384
          %v1401 = vmul.f32 %v1400, 0.6931472
          %v1402 = vlog2.pop %v1385
          %v1403 = vmul.f32 %v1402, 0.6931472
          %v1404 = vlog2.pop %v1386
          %v1405 = vmul.f32 %v1404, 0.6931472
          %v1406 = vlog2.pop %v1387
          %v1407 = vmul.f32 %v1406, 0.6931472
          %v1408 = vlog2.pop %v1388
          %v1409 = vmul.f32 %v1408, 0.6931472
          %v1410 = vlog2.pop %v1389
          %v1411 = vmul.f32 %v1410, 0.6931472
          %v1412 = vlog2.pop %v1390
          %v1413 = vmul.f32 %v1412, 0.6931472
          %v1414 = vlog2.pop %v1391
          %v1415 = vmul.f32 %v1414, 0.6931472
          %v1416 = vlog2.pop %v1392
          %v1417 = vmul.f32 %v1416, 0.6931472
          %v1418 = vlog2.pop %v1393
          %v1419 = vmul.f32 %v1418, 0.6931472
          %v1420 = vlog2.pop %v1394
          %v1421 = vmul.f32 %v1420, 0.6931472
          %v1422 = vlog2.pop %v1395
          %v1423 = vmul.f32 %v1422, 0.6931472
          %v1424 = vlog2.pop %v1396
          %v1425 = vmul.f32 %v1424, 0.6931472
          %v1426 = vlog2.pop %v1397
          %v1427 = vmul.f32 %v1426, 0.6931472
          %v1428 = vlog2.pop %v1398
          %v1429 = vmul.f32 %v1428, 0.6931472
          %v1430 = vlog2.pop %v1399
          %v1431 = vmul.f32 %v1430, 0.6931472
          %v1432 = vrcp.pop 2.0
          %v1433 = vmul.f32 %v1401, %v1432
          %v1434 = vmul.f32 %v1403, %v1432
          %v1435 = vmul.f32 %v1405, %v1432
          %v1436 = vmul.f32 %v1407, %v1432
          %v1437 = vmul.f32 %v1409, %v1432
          %v1438 = vmul.f32 %v1411, %v1432
          %v1439 = vmul.f32 %v1413, %v1432
          %v1440 = vmul.f32 %v1415, %v1432
          %v1441 = vmul.f32 %v1417, %v1432
          %v1442 = vmul.f32 %v1419, %v1432
          %v1443 = vmul.f32 %v1421, %v1432
          %v1444 = vmul.f32 %v1423, %v1432
          %v1445 = vmul.f32 %v1425, %v1432
          %v1446 = vmul.f32 %v1427, %v1432
          %v1447 = vmul.f32 %v1429, %v1432
          %v1448 = vmul.f32 %v1431, %v1432
          %v1449 = vadd.f32 %v1353, 1.0
          %v1450 = vadd.f32 %v1355, 1.0
          %v1451 = vadd.f32 %v1357, 1.0
          %v1452 = vadd.f32 %v1359, 1.0
          %v1453 = vadd.f32 %v1361, 1.0
          %v1454 = vadd.f32 %v1363, 1.0
          %v1455 = vadd.f32 %v1365, 1.0
          %v1456 = vadd.f32 %v1367, 1.0
          %v1457 = vadd.f32 %v1369, 1.0
          %v1458 = vadd.f32 %v1371, 1.0
          %v1459 = vadd.f32 %v1373, 1.0
          %v1460 = vadd.f32 %v1375, 1.0
          %v1461 = vadd.f32 %v1377, 1.0
          %v1462 = vadd.f32 %v1379, 1.0
          %v1463 = vadd.f32 %v1381, 1.0
          %v1464 = vadd.f32 %v1383, 1.0
          %v1465 = vlog2.pop %v1449
          %v1466 = vmul.f32 %v1465, 0.6931472
          %v1467 = vlog2.pop %v1450
          %v1468 = vmul.f32 %v1467, 0.6931472
          %v1469 = vlog2.pop %v1451
          %v1470 = vmul.f32 %v1469, 0.6931472
          %v1471 = vlog2.pop %v1452
          %v1472 = vmul.f32 %v1471, 0.6931472
          %v1473 = vlog2.pop %v1453
          %v1474 = vmul.f32 %v1473, 0.6931472
          %v1475 = vlog2.pop %v1454
          %v1476 = vmul.f32 %v1475, 0.6931472
          %v1477 = vlog2.pop %v1455
          %v1478 = vmul.f32 %v1477, 0.6931472
          %v1479 = vlog2.pop %v1456
          %v1480 = vmul.f32 %v1479, 0.6931472
          %v1481 = vlog2.pop %v1457
          %v1482 = vmul.f32 %v1481, 0.6931472
          %v1483 = vlog2.pop %v1458
          %v1484 = vmul.f32 %v1483, 0.6931472
          %v1485 = vlog2.pop %v1459
          %v1486 = vmul.f32 %v1485, 0.6931472
          %v1487 = vlog2.pop %v1460
          %v1488 = vmul.f32 %v1487, 0.6931472
          %v1489 = vlog2.pop %v1461
          %v1490 = vmul.f32 %v1489, 0.6931472
          %v1491 = vlog2.pop %v1462
          %v1492 = vmul.f32 %v1491, 0.6931472
          %v1493 = vlog2.pop %v1463
          %v1494 = vmul.f32 %v1493, 0.6931472
          %v1495 = vlog2.pop %v1464
          %v1496 = vmul.f32 %v1495, 0.6931472
          %v1497 = vrcp.pop 50.0
          %v1498 = vmul.f32 %v1466, %v1497
          %v1499 = vmul.f32 %v1468, %v1497
          %v1500 = vmul.f32 %v1470, %v1497
          %v1501 = vmul.f32 %v1472, %v1497
          %v1502 = vmul.f32 %v1474, %v1497
          %v1503 = vmul.f32 %v1476, %v1497
          %v1504 = vmul.f32 %v1478, %v1497
          %v1505 = vmul.f32 %v1480, %v1497
          %v1506 = vmul.f32 %v1482, %v1497
          %v1507 = vmul.f32 %v1484, %v1497
          %v1508 = vmul.f32 %v1486, %v1497
          %v1509 = vmul.f32 %v1488, %v1497
          %v1510 = vmul.f32 %v1490, %v1497
          %v1511 = vmul.f32 %v1492, %v1497
          %v1512 = vmul.f32 %v1494, %v1497
          %v1513 = vmul.f32 %v1496, %v1497
          %v1514 = vadd.f32 %v1433, %v1498
          %v1515 = vadd.f32 %v1434, %v1499
          %v1516 = vadd.f32 %v1435, %v1500
          %v1517 = vadd.f32 %v1436, %v1501
          %v1518 = vadd.f32 %v1437, %v1502
          %v1519 = vadd.f32 %v1438, %v1503
          %v1520 = vadd.f32 %v1439, %v1504
          %v1521 = vadd.f32 %v1440, %v1505
          %v1522 = vadd.f32 %v1441, %v1506
          %v1523 = vadd.f32 %v1442, %v1507
          %v1524 = vadd.f32 %v1443, %v1508
          %v1525 = vadd.f32 %v1444, %v1509
          %v1526 = vadd.f32 %v1445, %v1510
          %v1527 = vadd.f32 %v1446, %v1511
          %v1528 = vadd.f32 %v1447, %v1512
          %v1529 = vadd.f32 %v1448, %v1513
          %vm1530 = vcmask 7168
          %v1531 = vsel %vm1530, %v1514, 0.0
          %v1532 = vsel %vm1530, %v1515, 0.0
          %v1533 = vadd.f32 %v1531, %v1532
          %v1534 = vsel %vm1530, %v1516, 0.0
          %v1535 = vadd.f32 %v1533, %v1534
          %v1536 = vsel %vm1530, %v1517, 0.0
          %v1537 = vadd.f32 %v1535, %v1536
          %v1538 = vsel %vm1530, %v1518, 0.0
          %v1539 = vadd.f32 %v1537, %v1538
          %v1540 = vsel %vm1530, %v1519, 0.0
          %v1541 = vadd.f32 %v1539, %v1540
          %v1542 = vsel %vm1530, %v1520, 0.0
          %v1543 = vadd.f32 %v1541, %v1542
          %v1544 = vsel %vm1530, %v1521, 0.0
          %v1545 = vadd.f32 %v1543, %v1544
          %v1546 = vsel %vm1530, %v1522, 0.0
          %v1547 = vadd.f32 %v1545, %v1546
          %v1548 = vsel %vm1530, %v1523, 0.0
          %v1549 = vadd.f32 %v1547, %v1548
          %v1550 = vsel %vm1530, %v1524, 0.0
          %v1551 = vadd.f32 %v1549, %v1550
          %v1552 = vsel %vm1530, %v1525, 0.0
          %v1553 = vadd.f32 %v1551, %v1552
          %v1554 = vsel %vm1530, %v1526, 0.0
          %v1555 = vadd.f32 %v1553, %v1554
          %v1556 = vsel %vm1530, %v1527, 0.0
          %v1557 = vadd.f32 %v1555, %v1556
          %v1558 = vsel %vm1530, %v1528, 0.0
          %v1559 = vadd.f32 %v1557, %v1558
          %v1560 = vsel %vm1530, %v1529, 0.0
          %v1561 = vadd.f32 %v1559, %v1560
          %1562 = vadd.xlane.f32.xlu0 %v1561
          %v1563 = vpop.xlane.xlu0 %1562
          %v1564 = vrot.slane %v1563, 4
          %v1565 = vadd.f32 %v1563, %v1564
          %v1566 = vrot.slane %v1565, 2
          %v1567 = vadd.f32 %v1565, %v1566
          %v1568 = vrot.slane %v1567, 1
          %v1569 = vadd.f32 %v1567, %v1568
          %s1570 = vtos %v1569
          %v1571 = vld [vmem:[#allocation4] sm:$0xff]
          %v1572 = vld [vmem:[#allocation4 + $0x8] sm:$0xff]
          %v1573 = vld [vmem:[#allocation4 + $0x10] sm:$0xff]
          %v1574 = vld [vmem:[#allocation4 + $0x18] sm:$0xff]
          %v1575 = vld [vmem:[#allocation4 + $0x20] sm:$0xff]
          %v1576 = vld [vmem:[#allocation4 + $0x28] sm:$0xff]
          %v1577 = vld [vmem:[#allocation4 + $0x30] sm:$0xff]
          %v1578 = vld [vmem:[#allocation4 + $0x38] sm:$0xff]
          %v1579 = vld [vmem:[#allocation4 + $0x40] sm:$0xff]
          %v1580 = vld [vmem:[#allocation4 + $0x48] sm:$0xff]
          %v1581 = vld [vmem:[#allocation4 + $0x50] sm:$0xff]
          %v1582 = vld [vmem:[#allocation4 + $0x58] sm:$0xff]
          %v1583 = vld [vmem:[#allocation4 + $0x60] sm:$0xff]
          %v1584 = vld [vmem:[#allocation4 + $0x68] sm:$0xff]
          %v1585 = vld [vmem:[#allocation4 + $0x70] sm:$0xff]
          %v1586 = vld [vmem:[#allocation4 + $0x78] sm:$0xff]
          %v1587 = vadd.f32 %v1571, %v1572
          %v1588 = vadd.f32 %v1587, %v1573
          %v1589 = vadd.f32 %v1588, %v1574
          %v1590 = vadd.f32 %v1589, %v1575
          %v1591 = vadd.f32 %v1590, %v1576
          %v1592 = vadd.f32 %v1591, %v1577
          %v1593 = vadd.f32 %v1592, %v1578
          %v1594 = vadd.f32 %v1593, %v1579
          %v1595 = vadd.f32 %v1594, %v1580
          %v1596 = vadd.f32 %v1595, %v1581
          %v1597 = vadd.f32 %v1596, %v1582
          %v1598 = vadd.f32 %v1597, %v1583
          %v1599 = vadd.f32 %v1598, %v1584
          %v1600 = vadd.f32 %v1599, %v1585
          %v1601 = vadd.f32 %v1600, %v1586
          %1602 = vadd.xlane.f32.xlu0 %v1601
          %v1603 = vpop.xlane.xlu0 %1602
          %v1604 = vrot.slane %v1603, 4
          %v1605 = vadd.f32 %v1603, %v1604
          %v1606 = vrot.slane %v1605, 2
          %v1607 = vadd.f32 %v1605, %v1606
          %v1608 = vrot.slane %v1607, 1
          %v1609 = vadd.f32 %v1607, %v1608
          %s1610 = vtos %v1609
          %v1611 = vld [vmem:[#allocation5] sm:$0xff]
          %v1612 = vld [vmem:[#allocation5 + $0x8] sm:$0xff]
          %v1613 = vld [vmem:[#allocation5 + $0x10] sm:$0xff]
          %v1614 = vld [vmem:[#allocation5 + $0x18] sm:$0xff]
          %v1615 = vld [vmem:[#allocation5 + $0x20] sm:$0xff]
          %v1616 = vld [vmem:[#allocation5 + $0x28] sm:$0xff]
          %v1617 = vld [vmem:[#allocation5 + $0x30] sm:$0xff]
          %v1618 = vld [vmem:[#allocation5 + $0x38] sm:$0xff]
          %v1619 = vld [vmem:[#allocation5 + $0x40] sm:$0xff]
          %v1620 = vld [vmem:[#allocation5 + $0x48] sm:$0xff]
          %v1621 = vld [vmem:[#allocation5 + $0x50] sm:$0xff]
          %v1622 = vld [vmem:[#allocation5 + $0x58] sm:$0xff]
          %v1623 = vld [vmem:[#allocation5 + $0x60] sm:$0xff]
          %v1624 = vld [vmem:[#allocation5 + $0x68] sm:$0xff]
          %v1625 = vld [vmem:[#allocation5 + $0x70] sm:$0xff]
          %v1626 = vld [vmem:[#allocation5 + $0x78] sm:$0xff]
          %v1627 = vadd.f32 %v1611, %v1612
          %v1628 = vadd.f32 %v1627, %v1613
          %v1629 = vadd.f32 %v1628, %v1614
          %v1630 = vadd.f32 %v1629, %v1615
          %v1631 = vadd.f32 %v1630, %v1616
          %v1632 = vadd.f32 %v1631, %v1617
          %v1633 = vadd.f32 %v1632, %v1618
          %v1634 = vadd.f32 %v1633, %v1619
          %v1635 = vadd.f32 %v1634, %v1620
          %v1636 = vadd.f32 %v1635, %v1621
          %v1637 = vadd.f32 %v1636, %v1622
          %v1638 = vadd.f32 %v1637, %v1623
          %v1639 = vadd.f32 %v1638, %v1624
          %v1640 = vadd.f32 %v1639, %v1625
          %v1641 = vadd.f32 %v1640, %v1626
          %1642 = vadd.xlane.f32.xlu0 %v1641
          %v1643 = vpop.xlane.xlu0 %1642
          %v1644 = vrot.slane %v1643, 4
          %v1645 = vadd.f32 %v1643, %v1644
          %v1646 = vrot.slane %v1645, 2
          %v1647 = vadd.f32 %v1645, %v1646
          %v1648 = vrot.slane %v1647, 1
          %v1649 = vadd.f32 %v1647, %v1648
          %s1650 = vtos %v1649
          %vm1651 = vcmp.eq.s32.totalorder %v803, 0
          %v1652 = vstv %s1570
          %v1653 = vsel %vm1651, %v1652, 0.0
          %vm1654 = vcmp.eq.s32.totalorder %v803, 1
          %v1655 = vstv %s1610
          %v1656 = vsel %vm1654, %v1655, %v1653
          %vm1657 = vcmp.eq.s32.totalorder %v803, 2
          %v1658 = vstv %s1650
          %v1659 = vsel %vm1657, %v1658, %v1656
          %1660 = vst [vmem:[%s246] sm:$0xff] %v1659
        $region44: #{tpu_custom_call.1} parent=35 // pred_fallthru
          _
        %s1661 = sand.u32 %s142, 1
        %s1662 = scalar_lea.sflag [#allocation7], %s1661
        %s1663 = sand.u32 %s142, 1
        %s1664 = smul.addr %s1663, 8
        %s1665 = scalar_lea.vmem [#allocation6], %s1664
        // Predicated region
        $region45: #{tpu_custom_call.1} parent=35 // pred_check
          %p1666 = pneg %p152
        $region46: #{tpu_custom_call.1} parent=35 // pred_check_branch
          %1668 = sbr.rel (%p1666) target = $region48
        $region47: #{tpu_custom_call.1} parent=35 // pred_region
          %s1670 = ssub.s32 128, 128
          %1671 = vsyncadd %s1662, %s1670
          %s1672 = smul.addr %s22, 128
          %s1673 = scalar_lea.hbm %s4, %s1672
          %s1675 = sshll.u32 %s1665, 4
          %s1676 = int_to_ptr.vmem [resolvable:$true] %s1675
          %1678 = dma.vmem_to_hbm [thread:$0]  %s1676, 128, %s1673, %s1662
        $region48: #{tpu_custom_call.1} parent=35 // pred_fallthru
          _
      $region36: #{tpu_custom_call.1} parent=5 // pred_fallthru
        _
      %p1679 = scmp.le.s32.totalorder 2, %s13
      // Predicated region
      $region49: #{tpu_custom_call.1} parent=5 // pred_check
        %p1680 = pneg %p1679
      $region50: #{tpu_custom_call.1} parent=5 // pred_check_branch
        %1682 = sbr.rel (%p1680) target = $region52
      $region51: #{tpu_custom_call.1} parent=5 // pred_region
        %s1683 = ssub.s32 %s13, 2
        // Predicated region
        $region53: #{tpu_custom_call.1} parent=51 // pred_check
          %p1684 = pneg %p158
        $region54: #{tpu_custom_call.1} parent=51 // pred_check_branch
          %1686 = sbr.rel (%p1684) target = $region56
        $region55: #{tpu_custom_call.1} parent=51 // pred_region
          %s1687 = sand.u32 %s143, 1
          %s1688 = scalar_lea.sflag [#allocation7], %s1687
          %s1689 = sand.u32 %s143, 1
          %s1690 = smul.addr %s1689, 8
          %s1691 = scalar_lea.vmem [#allocation6], %s1690
          %1692 = dma.done %s1688, 128
        $region56: #{tpu_custom_call.1} parent=51 // pred_fallthru
          _
      $region52: #{tpu_custom_call.1} parent=5 // pred_fallthru
        _
    $region6: #{tpu_custom_call.1} parent=1 // loop_footer
      %s17 = sadd.s32 1, %s13
    $region7: #{tpu_custom_call.1} parent=1 // loop_footer_branch
      %12 = sbr.rel target = $region3
    $region8: #{tpu_custom_call.1} parent=1 // loop_exit
      _
    %1693 = vsyncpa [#allocation7], 1
    %s1694 = scalar_lea.sflag [#allocation7], 1
    %1695 = vsyncpa %s1694, 1

</llo_original>
